<compile_context>
chip_gen: v7x
topology: tpu7x:2x2x1
jax: 0.10.0
libtpu: 0.0.40
codegen_flags: <defaults>
</compile_context>

<pallas_src>
import jax
import jax.numpy as jnp
from jax import lax
from jax.experimental import pallas as pl
from jax.experimental.pallas import tpu as pltpu


def lstm_regression_kernel(xg_ref, wh_ref, wfc_ref, bfc_ref, out_ref):
    """LSTM recurrence (input projection pre-hoisted) + final Linear.

    xg_ref : (T, Bp, 4*HP)  precomputed x @ Wx + b, gate-slab padded layout
    wh_ref : (HP, 4*HP)     hidden->gates weights; rows >= H and padded lanes = 0
    wfc_ref: (HP, 128)      fc weight in column 0, rest 0
    bfc_ref: (1, 128)       fc bias in lane 0, rest 0
    out_ref: (Bp, 128)      fc output in lane 0 (lane-dense output tile)
    """
    T, Bp, GP = xg_ref.shape
    HP = GP // 4

    # h0 = c0 = 0 (matches torch.zeros in forward()); carried in vregs, not VMEM.
    h = jnp.zeros((Bp, HP), jnp.float32)
    c = jnp.zeros((Bp, HP), jnp.float32)

    # Statically unrolled recurrence (T is a compile-time constant).
    for t in range(T):
        gates = xg_ref[t] + jnp.dot(h, wh_ref[...],
                                    preferred_element_type=jnp.float32)  # (Bp, GP)
        # Each gate is a full 128-lane slab -> vreg-aligned slices, no shuffles.
        i = jax.nn.sigmoid(gates[:, 0 * HP:1 * HP])
        f = jax.nn.sigmoid(gates[:, 1 * HP:2 * HP])
        g = jnp.tanh(gates[:, 2 * HP:3 * HP])
        o = jax.nn.sigmoid(gates[:, 3 * HP:4 * HP])
        c = f * c + i * g
        h = o * jnp.tanh(c)

    # fc fused after the last unrolled step: out = h_T @ W_fc^T + b_fc.
    out_ref[...] = (jnp.dot(h, wfc_ref[...], preferred_element_type=jnp.float32)
                    + bfc_ref[...])


def lstm_regression_forward(x, w_ih, w_hh, b_ih, b_hh, w_fc, b_fc):
    """x: (B, T, I) batch-first float32.  Returns (B, 1) = fc(lstm(x)[:, -1, :])."""
    f32 = jnp.float32
    B, T, I = x.shape
    H = w_hh.shape[1]
    HP = 128                           # per-gate lane-slab width (vreg lane count)
    GP = 4 * HP
    Bp = max(8, ((B + 7) // 8) * 8)    # pad batch to the f32 sublane count

    # ---- gate-slab-padded parameters (one-time layout plumbing) ----
    w_ih_t = w_ih.T.astype(f32)        # (I, 4H)
    w_hh_t = w_hh.T.astype(f32)        # (H, 4H)
    b_sum = (b_ih + b_hh).astype(f32)  # (4H,)
    wx = jnp.zeros((I, GP), f32)
    wh = jnp.zeros((HP, GP), f32)
    b = jnp.zeros((1, GP), f32)
    for k in range(4):                 # gate order [i, f, g, o]
        wx = wx.at[:, k * HP:k * HP + H].set(w_ih_t[:, k * H:(k + 1) * H])
        wh = wh.at[:H, k * HP:k * HP + H].set(w_hh_t[:, k * H:(k + 1) * H])
        b = b.at[0, k * HP:k * HP + H].set(b_sum[k * H:(k + 1) * H])
    wfc = jnp.zeros((HP, 128), f32).at[:H, 0].set(w_fc[0, :].astype(f32))
    bfc = jnp.zeros((1, 128), f32).at[0, 0].set(b_fc[0].astype(f32))

    # ---- hoisted input projection: one matmul for all timesteps ----
    x_p = jnp.zeros((Bp, T, I), f32).at[:B].set(x.astype(f32))
    x_tm = jnp.transpose(x_p, (1, 0, 2))              # (T, Bp, I) time-major
    xg = jnp.einsum('tbi,ig->tbg', x_tm, wx) + b      # (T, Bp, GP), lane-dense

    vmem = pl.BlockSpec(memory_space=pltpu.MemorySpace.VMEM)
    out = pl.pallas_call(
        lstm_regression_kernel,
        out_shape=jax.ShapeDtypeStruct((Bp, 128), f32),
        in_specs=[vmem] * 4,
        out_specs=vmem,
        # TODO(synk): for large batches/sequences, add a batch-chunk grid axis with
        # dimension_semantics=("parallel",) (fills both v7x TensorCores) and tile
        # the time axis of xg with an "arbitrary" grid axis if it would exceed
        # v7x's 64 MiB VMEM; unnecessary at this toy size.
    )(xg, wh, wfc, bfc)
    return out[:B, :1]


def lstm_regression_reference(x, w_ih, w_hh, b_ih, b_hh, w_fc, b_fc):
    """Pure-JAX reference mirroring torch.nn.LSTM semantics."""
    B, T, I = x.shape
    H = w_hh.shape[1]
    h = jnp.zeros((B, H), jnp.float32)
    c = jnp.zeros((B, H), jnp.float32)

    def step(carry, x_t):
        h, c = carry
        gates = x_t @ w_ih.T + h @ w_hh.T + b_ih + b_hh
        i = jax.nn.sigmoid(gates[:, 0 * H:1 * H])
        f = jax.nn.sigmoid(gates[:, 1 * H:2 * H])
        g = jnp.tanh(gates[:, 2 * H:3 * H])
        o = jax.nn.sigmoid(gates[:, 3 * H:4 * H])
        c = f * c + i * g
        h = o * jnp.tanh(c)
        return (h, c), None

    (h, c), _ = lax.scan(step, (h, c), jnp.transpose(x, (1, 0, 2)))
    return h @ w_fc.T + b_fc


if __name__ == "__main__":
    # Module config: input_size=1, hidden_size=32, num_layers=1, unidirectional
    B, T, I, H = 2, 8, 1, 32

    key = jax.random.PRNGKey(0)
    ks = jax.random.split(key, 7)
    scale = 1.0 / jnp.sqrt(H)
    x    = jax.random.normal(ks[0], (B, T, I), dtype=jnp.float32)
    w_ih = jax.random.uniform(ks[1], (4 * H, I), jnp.float32, -scale, scale)
    w_hh = jax.random.uniform(ks[2], (4 * H, H), jnp.float32, -scale, scale)
    b_ih = jax.random.uniform(ks[3], (4 * H,), jnp.float32, -scale, scale)
    b_hh = jax.random.uniform(ks[4], (4 * H,), jnp.float32, -scale, scale)
    w_fc = jax.random.uniform(ks[5], (1, H), jnp.float32, -scale, scale)
    b_fc = jax.random.uniform(ks[6], (1,), jnp.float32, -scale, scale)

    out = lstm_regression_forward(x, w_ih, w_hh, b_ih, b_hh, w_fc, b_fc)
    out = jax.block_until_ready(out)

    ref = lstm_regression_reference(x, w_ih, w_hh, b_ih, b_hh, w_fc, b_fc)
    assert out.shape == (B, 1)
    assert jnp.allclose(out, ref, atol=1e-5, rtol=1e-5), (out, ref)

    print("KERNEL_OK")
</pallas_src>

<mosaic_0001>
module attributes {stable_mosaic.version = 11 : i64} {
  func.func @lstm_regression_kernel(%arg0: memref<8x8x512xf32, #tpu.memory_space<vmem>>, %arg1: memref<128x512xf32, #tpu.memory_space<vmem>>, %arg2: memref<128x128xf32, #tpu.memory_space<vmem>>, %arg3: memref<1x128xf32, #tpu.memory_space<vmem>>, %arg4: memref<8x128xf32, #tpu.memory_space<vmem>>) attributes {dimension_semantics = [], scalar_prefetch = 0 : i64, scratch_operands = 0 : i64, tpu.core_type = #tpu.core_type<tc>} {
    %cst = arith.constant 0.000000e+00 : f32
    %0 = vector.broadcast %cst : f32 to vector<8x128xf32>
    %cst_0 = arith.constant 0.000000e+00 : f32
    %1 = vector.broadcast %cst_0 : f32 to vector<8x128xf32>
    %c0 = arith.constant 0 : index
    %c0_1 = arith.constant 0 : index
    %c0_2 = arith.constant 0 : index
    %2 = vector.load %arg0[%c0, %c0_1, %c0_2] : memref<8x8x512xf32, #tpu.memory_space<vmem>>, vector<1x8x512xf32>
    %3 = vector.shape_cast %2 : vector<1x8x512xf32> to vector<8x512xf32>
    %c0_3 = arith.constant 0 : index
    %c0_4 = arith.constant 0 : index
    %4 = vector.load %arg1[%c0_3, %c0_4] : memref<128x512xf32, #tpu.memory_space<vmem>>, vector<128x512xf32>
    %cst_5 = arith.constant dense<0.000000e+00> : vector<8x512xf32>
    %5 = tpu.matmul %0, %4, %cst_5 {dimension_numbers = #tpu.dot_dimension_numbers<[1], [0], [0], [1], [0, 0, 1, 1], [], []>} : vector<8x128xf32>, vector<128x512xf32>, vector<8x512xf32> -> vector<8x512xf32>
    %6 = arith.addf %3, %5 : vector<8x512xf32>
    %7 = vector.extract_strided_slice %6 {offsets = [0, 0], sizes = [8, 128], strides = [1, 1]} : vector<8x512xf32> to vector<8x128xf32>
    %8 = arith.negf %7 : vector<8x128xf32>
    %9 = math.exp %8 : vector<8x128xf32>
    %cst_6 = arith.constant 1.000000e+00 : f32
    %10 = vector.broadcast %cst_6 : f32 to vector<8x128xf32>
    %11 = arith.addf %10, %9 : vector<8x128xf32>
    %12 = arith.divf %10, %11 : vector<8x128xf32>
    %13 = vector.extract_strided_slice %6 {offsets = [0, 128], sizes = [8, 128], strides = [1, 1]} : vector<8x512xf32> to vector<8x128xf32>
    %14 = arith.negf %13 : vector<8x128xf32>
    %15 = math.exp %14 : vector<8x128xf32>
    %cst_7 = arith.constant 1.000000e+00 : f32
    %16 = vector.broadcast %cst_7 : f32 to vector<8x128xf32>
    %17 = arith.addf %16, %15 : vector<8x128xf32>
    %18 = arith.divf %16, %17 : vector<8x128xf32>
    %19 = vector.extract_strided_slice %6 {offsets = [0, 256], sizes = [8, 128], strides = [1, 1]} : vector<8x512xf32> to vector<8x128xf32>
    %20 = math.tanh %19 : vector<8x128xf32>
    %21 = vector.extract_strided_slice %6 {offsets = [0, 384], sizes = [8, 128], strides = [1, 1]} : vector<8x512xf32> to vector<8x128xf32>
    %22 = arith.negf %21 : vector<8x128xf32>
    %23 = math.exp %22 : vector<8x128xf32>
    %cst_8 = arith.constant 1.000000e+00 : f32
    %24 = vector.broadcast %cst_8 : f32 to vector<8x128xf32>
    %25 = arith.addf %24, %23 : vector<8x128xf32>
    %26 = arith.divf %24, %25 : vector<8x128xf32>
    %27 = arith.mulf %18, %1 : vector<8x128xf32>
    %28 = arith.mulf %12, %20 : vector<8x128xf32>
    %29 = arith.addf %27, %28 : vector<8x128xf32>
    %30 = math.tanh %29 : vector<8x128xf32>
    %31 = arith.mulf %26, %30 : vector<8x128xf32>
    %c1 = arith.constant 1 : index
    %c0_9 = arith.constant 0 : index
    %c0_10 = arith.constant 0 : index
    %32 = vector.load %arg0[%c1, %c0_9, %c0_10] : memref<8x8x512xf32, #tpu.memory_space<vmem>>, vector<1x8x512xf32>
    %33 = vector.shape_cast %32 : vector<1x8x512xf32> to vector<8x512xf32>
    %c0_11 = arith.constant 0 : index
    %c0_12 = arith.constant 0 : index
    %34 = vector.load %arg1[%c0_11, %c0_12] : memref<128x512xf32, #tpu.memory_space<vmem>>, vector<128x512xf32>
    %cst_13 = arith.constant dense<0.000000e+00> : vector<8x512xf32>
    %35 = tpu.matmul %31, %34, %cst_13 {dimension_numbers = #tpu.dot_dimension_numbers<[1], [0], [0], [1], [0, 0, 1, 1], [], []>} : vector<8x128xf32>, vector<128x512xf32>, vector<8x512xf32> -> vector<8x512xf32>
    %36 = arith.addf %33, %35 : vector<8x512xf32>
    %37 = vector.extract_strided_slice %36 {offsets = [0, 0], sizes = [8, 128], strides = [1, 1]} : vector<8x512xf32> to vector<8x128xf32>
    %38 = arith.negf %37 : vector<8x128xf32>
    %39 = math.exp %38 : vector<8x128xf32>
    %cst_14 = arith.constant 1.000000e+00 : f32
    %40 = vector.broadcast %cst_14 : f32 to vector<8x128xf32>
    %41 = arith.addf %40, %39 : vector<8x128xf32>
    %42 = arith.divf %40, %41 : vector<8x128xf32>
    %43 = vector.extract_strided_slice %36 {offsets = [0, 128], sizes = [8, 128], strides = [1, 1]} : vector<8x512xf32> to vector<8x128xf32>
    %44 = arith.negf %43 : vector<8x128xf32>
    %45 = math.exp %44 : vector<8x128xf32>
    %cst_15 = arith.constant 1.000000e+00 : f32
    %46 = vector.broadcast %cst_15 : f32 to vector<8x128xf32>
    %47 = arith.addf %46, %45 : vector<8x128xf32>
    %48 = arith.divf %46, %47 : vector<8x128xf32>
    %49 = vector.extract_strided_slice %36 {offsets = [0, 256], sizes = [8, 128], strides = [1, 1]} : vector<8x512xf32> to vector<8x128xf32>
    %50 = math.tanh %49 : vector<8x128xf32>
    %51 = vector.extract_strided_slice %36 {offsets = [0, 384], sizes = [8, 128], strides = [1, 1]} : vector<8x512xf32> to vector<8x128xf32>
    %52 = arith.negf %51 : vector<8x128xf32>
    %53 = math.exp %52 : vector<8x128xf32>
    %cst_16 = arith.constant 1.000000e+00 : f32
    %54 = vector.broadcast %cst_16 : f32 to vector<8x128xf32>
    %55 = arith.addf %54, %53 : vector<8x128xf32>
    %56 = arith.divf %54, %55 : vector<8x128xf32>
    %57 = arith.mulf %48, %29 : vector<8x128xf32>
    %58 = arith.mulf %42, %50 : vector<8x128xf32>
    %59 = arith.addf %57, %58 : vector<8x128xf32>
    %60 = math.tanh %59 : vector<8x128xf32>
    %61 = arith.mulf %56, %60 : vector<8x128xf32>
    %c2 = arith.constant 2 : index
    %c0_17 = arith.constant 0 : index
    %c0_18 = arith.constant 0 : index
    %62 = vector.load %arg0[%c2, %c0_17, %c0_18] : memref<8x8x512xf32, #tpu.memory_space<vmem>>, vector<1x8x512xf32>
    %63 = vector.shape_cast %62 : vector<1x8x512xf32> to vector<8x512xf32>
    %c0_19 = arith.constant 0 : index
    %c0_20 = arith.constant 0 : index
    %64 = vector.load %arg1[%c0_19, %c0_20] : memref<128x512xf32, #tpu.memory_space<vmem>>, vector<128x512xf32>
    %cst_21 = arith.constant dense<0.000000e+00> : vector<8x512xf32>
    %65 = tpu.matmul %61, %64, %cst_21 {dimension_numbers = #tpu.dot_dimension_numbers<[1], [0], [0], [1], [0, 0, 1, 1], [], []>} : vector<8x128xf32>, vector<128x512xf32>, vector<8x512xf32> -> vector<8x512xf32>
    %66 = arith.addf %63, %65 : vector<8x512xf32>
    %67 = vector.extract_strided_slice %66 {offsets = [0, 0], sizes = [8, 128], strides = [1, 1]} : vector<8x512xf32> to vector<8x128xf32>
    %68 = arith.negf %67 : vector<8x128xf32>
    %69 = math.exp %68 : vector<8x128xf32>
    %cst_22 = arith.constant 1.000000e+00 : f32
    %70 = vector.broadcast %cst_22 : f32 to vector<8x128xf32>
    %71 = arith.addf %70, %69 : vector<8x128xf32>
    %72 = arith.divf %70, %71 : vector<8x128xf32>
    %73 = vector.extract_strided_slice %66 {offsets = [0, 128], sizes = [8, 128], strides = [1, 1]} : vector<8x512xf32> to vector<8x128xf32>
    %74 = arith.negf %73 : vector<8x128xf32>
    %75 = math.exp %74 : vector<8x128xf32>
    %cst_23 = arith.constant 1.000000e+00 : f32
    %76 = vector.broadcast %cst_23 : f32 to vector<8x128xf32>
    %77 = arith.addf %76, %75 : vector<8x128xf32>
    %78 = arith.divf %76, %77 : vector<8x128xf32>
    %79 = vector.extract_strided_slice %66 {offsets = [0, 256], sizes = [8, 128], strides = [1, 1]} : vector<8x512xf32> to vector<8x128xf32>
    %80 = math.tanh %79 : vector<8x128xf32>
    %81 = vector.extract_strided_slice %66 {offsets = [0, 384], sizes = [8, 128], strides = [1, 1]} : vector<8x512xf32> to vector<8x128xf32>
    %82 = arith.negf %81 : vector<8x128xf32>
    %83 = math.exp %82 : vector<8x128xf32>
    %cst_24 = arith.constant 1.000000e+00 : f32
    %84 = vector.broadcast %cst_24 : f32 to vector<8x128xf32>
    %85 = arith.addf %84, %83 : vector<8x128xf32>
    %86 = arith.divf %84, %85 : vector<8x128xf32>
    %87 = arith.mulf %78, %59 : vector<8x128xf32>
    %88 = arith.mulf %72, %80 : vector<8x128xf32>
    %89 = arith.addf %87, %88 : vector<8x128xf32>
    %90 = math.tanh %89 : vector<8x128xf32>
    %91 = arith.mulf %86, %90 : vector<8x128xf32>
    %c3 = arith.constant 3 : index
    %c0_25 = arith.constant 0 : index
    %c0_26 = arith.constant 0 : index
    %92 = vector.load %arg0[%c3, %c0_25, %c0_26] : memref<8x8x512xf32, #tpu.memory_space<vmem>>, vector<1x8x512xf32>
    %93 = vector.shape_cast %92 : vector<1x8x512xf32> to vector<8x512xf32>
    %c0_27 = arith.constant 0 : index
    %c0_28 = arith.constant 0 : index
    %94 = vector.load %arg1[%c0_27, %c0_28] : memref<128x512xf32, #tpu.memory_space<vmem>>, vector<128x512xf32>
    %cst_29 = arith.constant dense<0.000000e+00> : vector<8x512xf32>
    %95 = tpu.matmul %91, %94, %cst_29 {dimension_numbers = #tpu.dot_dimension_numbers<[1], [0], [0], [1], [0, 0, 1, 1], [], []>} : vector<8x128xf32>, vector<128x512xf32>, vector<8x512xf32> -> vector<8x512xf32>
    %96 = arith.addf %93, %95 : vector<8x512xf32>
    %97 = vector.extract_strided_slice %96 {offsets = [0, 0], sizes = [8, 128], strides = [1, 1]} : vector<8x512xf32> to vector<8x128xf32>
    %98 = arith.negf %97 : vector<8x128xf32>
    %99 = math.exp %98 : vector<8x128xf32>
    %cst_30 = arith.constant 1.000000e+00 : f32
    %100 = vector.broadcast %cst_30 : f32 to vector<8x128xf32>
    %101 = arith.addf %100, %99 : vector<8x128xf32>
    %102 = arith.divf %100, %101 : vector<8x128xf32>
    %103 = vector.extract_strided_slice %96 {offsets = [0, 128], sizes = [8, 128], strides = [1, 1]} : vector<8x512xf32> to vector<8x128xf32>
    %104 = arith.negf %103 : vector<8x128xf32>
    %105 = math.exp %104 : vector<8x128xf32>
    %cst_31 = arith.constant 1.000000e+00 : f32
    %106 = vector.broadcast %cst_31 : f32 to vector<8x128xf32>
    %107 = arith.addf %106, %105 : vector<8x128xf32>
    %108 = arith.divf %106, %107 : vector<8x128xf32>
    %109 = vector.extract_strided_slice %96 {offsets = [0, 256], sizes = [8, 128], strides = [1, 1]} : vector<8x512xf32> to vector<8x128xf32>
    %110 = math.tanh %109 : vector<8x128xf32>
    %111 = vector.extract_strided_slice %96 {offsets = [0, 384], sizes = [8, 128], strides = [1, 1]} : vector<8x512xf32> to vector<8x128xf32>
    %112 = arith.negf %111 : vector<8x128xf32>
    %113 = math.exp %112 : vector<8x128xf32>
    %cst_32 = arith.constant 1.000000e+00 : f32
    %114 = vector.broadcast %cst_32 : f32 to vector<8x128xf32>
    %115 = arith.addf %114, %113 : vector<8x128xf32>
    %116 = arith.divf %114, %115 : vector<8x128xf32>
    %117 = arith.mulf %108, %89 : vector<8x128xf32>
    %118 = arith.mulf %102, %110 : vector<8x128xf32>
    %119 = arith.addf %117, %118 : vector<8x128xf32>
    %120 = math.tanh %119 : vector<8x128xf32>
    %121 = arith.mulf %116, %120 : vector<8x128xf32>
    %c4 = arith.constant 4 : index
    %c0_33 = arith.constant 0 : index
    %c0_34 = arith.constant 0 : index
    %122 = vector.load %arg0[%c4, %c0_33, %c0_34] : memref<8x8x512xf32, #tpu.memory_space<vmem>>, vector<1x8x512xf32>
    %123 = vector.shape_cast %122 : vector<1x8x512xf32> to vector<8x512xf32>
    %c0_35 = arith.constant 0 : index
    %c0_36 = arith.constant 0 : index
    %124 = vector.load %arg1[%c0_35, %c0_36] : memref<128x512xf32, #tpu.memory_space<vmem>>, vector<128x512xf32>
    %cst_37 = arith.constant dense<0.000000e+00> : vector<8x512xf32>
    %125 = tpu.matmul %121, %124, %cst_37 {dimension_numbers = #tpu.dot_dimension_numbers<[1], [0], [0], [1], [0, 0, 1, 1], [], []>} : vector<8x128xf32>, vector<128x512xf32>, vector<8x512xf32> -> vector<8x512xf32>
    %126 = arith.addf %123, %125 : vector<8x512xf32>
    %127 = vector.extract_strided_slice %126 {offsets = [0, 0], sizes = [8, 128], strides = [1, 1]} : vector<8x512xf32> to vector<8x128xf32>
    %128 = arith.negf %127 : vector<8x128xf32>
    %129 = math.exp %128 : vector<8x128xf32>
    %cst_38 = arith.constant 1.000000e+00 : f32
    %130 = vector.broadcast %cst_38 : f32 to vector<8x128xf32>
    %131 = arith.addf %130, %129 : vector<8x128xf32>
    %132 = arith.divf %130, %131 : vector<8x128xf32>
    %133 = vector.extract_strided_slice %126 {offsets = [0, 128], sizes = [8, 128], strides = [1, 1]} : vector<8x512xf32> to vector<8x128xf32>
    %134 = arith.negf %133 : vector<8x128xf32>
    %135 = math.exp %134 : vector<8x128xf32>
    %cst_39 = arith.constant 1.000000e+00 : f32
    %136 = vector.broadcast %cst_39 : f32 to vector<8x128xf32>
    %137 = arith.addf %136, %135 : vector<8x128xf32>
    %138 = arith.divf %136, %137 : vector<8x128xf32>
    %139 = vector.extract_strided_slice %126 {offsets = [0, 256], sizes = [8, 128], strides = [1, 1]} : vector<8x512xf32> to vector<8x128xf32>
    %140 = math.tanh %139 : vector<8x128xf32>
    %141 = vector.extract_strided_slice %126 {offsets = [0, 384], sizes = [8, 128], strides = [1, 1]} : vector<8x512xf32> to vector<8x128xf32>
    %142 = arith.negf %141 : vector<8x128xf32>
    %143 = math.exp %142 : vector<8x128xf32>
    %cst_40 = arith.constant 1.000000e+00 : f32
    %144 = vector.broadcast %cst_40 : f32 to vector<8x128xf32>
    %145 = arith.addf %144, %143 : vector<8x128xf32>
    %146 = arith.divf %144, %145 : vector<8x128xf32>
    %147 = arith.mulf %138, %119 : vector<8x128xf32>
    %148 = arith.mulf %132, %140 : vector<8x128xf32>
    %149 = arith.addf %147, %148 : vector<8x128xf32>
    %150 = math.tanh %149 : vector<8x128xf32>
    %151 = arith.mulf %146, %150 : vector<8x128xf32>
    %c5 = arith.constant 5 : index
    %c0_41 = arith.constant 0 : index
    %c0_42 = arith.constant 0 : index
    %152 = vector.load %arg0[%c5, %c0_41, %c0_42] : memref<8x8x512xf32, #tpu.memory_space<vmem>>, vector<1x8x512xf32>
    %153 = vector.shape_cast %152 : vector<1x8x512xf32> to vector<8x512xf32>
    %c0_43 = arith.constant 0 : index
    %c0_44 = arith.constant 0 : index
    %154 = vector.load %arg1[%c0_43, %c0_44] : memref<128x512xf32, #tpu.memory_space<vmem>>, vector<128x512xf32>
    %cst_45 = arith.constant dense<0.000000e+00> : vector<8x512xf32>
    %155 = tpu.matmul %151, %154, %cst_45 {dimension_numbers = #tpu.dot_dimension_numbers<[1], [0], [0], [1], [0, 0, 1, 1], [], []>} : vector<8x128xf32>, vector<128x512xf32>, vector<8x512xf32> -> vector<8x512xf32>
    %156 = arith.addf %153, %155 : vector<8x512xf32>
    %157 = vector.extract_strided_slice %156 {offsets = [0, 0], sizes = [8, 128], strides = [1, 1]} : vector<8x512xf32> to vector<8x128xf32>
    %158 = arith.negf %157 : vector<8x128xf32>
    %159 = math.exp %158 : vector<8x128xf32>
    %cst_46 = arith.constant 1.000000e+00 : f32
    %160 = vector.broadcast %cst_46 : f32 to vector<8x128xf32>
    %161 = arith.addf %160, %159 : vector<8x128xf32>
    %162 = arith.divf %160, %161 : vector<8x128xf32>
    %163 = vector.extract_strided_slice %156 {offsets = [0, 128], sizes = [8, 128], strides = [1, 1]} : vector<8x512xf32> to vector<8x128xf32>
    %164 = arith.negf %163 : vector<8x128xf32>
    %165 = math.exp %164 : vector<8x128xf32>
    %cst_47 = arith.constant 1.000000e+00 : f32
    %166 = vector.broadcast %cst_47 : f32 to vector<8x128xf32>
    %167 = arith.addf %166, %165 : vector<8x128xf32>
    %168 = arith.divf %166, %167 : vector<8x128xf32>
    %169 = vector.extract_strided_slice %156 {offsets = [0, 256], sizes = [8, 128], strides = [1, 1]} : vector<8x512xf32> to vector<8x128xf32>
    %170 = math.tanh %169 : vector<8x128xf32>
    %171 = vector.extract_strided_slice %156 {offsets = [0, 384], sizes = [8, 128], strides = [1, 1]} : vector<8x512xf32> to vector<8x128xf32>
    %172 = arith.negf %171 : vector<8x128xf32>
    %173 = math.exp %172 : vector<8x128xf32>
    %cst_48 = arith.constant 1.000000e+00 : f32
    %174 = vector.broadcast %cst_48 : f32 to vector<8x128xf32>
    %175 = arith.addf %174, %173 : vector<8x128xf32>
    %176 = arith.divf %174, %175 : vector<8x128xf32>
    %177 = arith.mulf %168, %149 : vector<8x128xf32>
    %178 = arith.mulf %162, %170 : vector<8x128xf32>
    %179 = arith.addf %177, %178 : vector<8x128xf32>
    %180 = math.tanh %179 : vector<8x128xf32>
    %181 = arith.mulf %176, %180 : vector<8x128xf32>
    %c6 = arith.constant 6 : index
    %c0_49 = arith.constant 0 : index
    %c0_50 = arith.constant 0 : index
    %182 = vector.load %arg0[%c6, %c0_49, %c0_50] : memref<8x8x512xf32, #tpu.memory_space<vmem>>, vector<1x8x512xf32>
    %183 = vector.shape_cast %182 : vector<1x8x512xf32> to vector<8x512xf32>
    %c0_51 = arith.constant 0 : index
    %c0_52 = arith.constant 0 : index
    %184 = vector.load %arg1[%c0_51, %c0_52] : memref<128x512xf32, #tpu.memory_space<vmem>>, vector<128x512xf32>
    %cst_53 = arith.constant dense<0.000000e+00> : vector<8x512xf32>
    %185 = tpu.matmul %181, %184, %cst_53 {dimension_numbers = #tpu.dot_dimension_numbers<[1], [0], [0], [1], [0, 0, 1, 1], [], []>} : vector<8x128xf32>, vector<128x512xf32>, vector<8x512xf32> -> vector<8x512xf32>
    %186 = arith.addf %183, %185 : vector<8x512xf32>
    %187 = vector.extract_strided_slice %186 {offsets = [0, 0], sizes = [8, 128], strides = [1, 1]} : vector<8x512xf32> to vector<8x128xf32>
    %188 = arith.negf %187 : vector<8x128xf32>
    %189 = math.exp %188 : vector<8x128xf32>
    %cst_54 = arith.constant 1.000000e+00 : f32
    %190 = vector.broadcast %cst_54 : f32 to vector<8x128xf32>
    %191 = arith.addf %190, %189 : vector<8x128xf32>
    %192 = arith.divf %190, %191 : vector<8x128xf32>
    %193 = vector.extract_strided_slice %186 {offsets = [0, 128], sizes = [8, 128], strides = [1, 1]} : vector<8x512xf32> to vector<8x128xf32>
    %194 = arith.negf %193 : vector<8x128xf32>
    %195 = math.exp %194 : vector<8x128xf32>
    %cst_55 = arith.constant 1.000000e+00 : f32
    %196 = vector.broadcast %cst_55 : f32 to vector<8x128xf32>
    %197 = arith.addf %196, %195 : vector<8x128xf32>
    %198 = arith.divf %196, %197 : vector<8x128xf32>
    %199 = vector.extract_strided_slice %186 {offsets = [0, 256], sizes = [8, 128], strides = [1, 1]} : vector<8x512xf32> to vector<8x128xf32>
    %200 = math.tanh %199 : vector<8x128xf32>
    %201 = vector.extract_strided_slice %186 {offsets = [0, 384], sizes = [8, 128], strides = [1, 1]} : vector<8x512xf32> to vector<8x128xf32>
    %202 = arith.negf %201 : vector<8x128xf32>
    %203 = math.exp %202 : vector<8x128xf32>
    %cst_56 = arith.constant 1.000000e+00 : f32
    %204 = vector.broadcast %cst_56 : f32 to vector<8x128xf32>
    %205 = arith.addf %204, %203 : vector<8x128xf32>
    %206 = arith.divf %204, %205 : vector<8x128xf32>
    %207 = arith.mulf %198, %179 : vector<8x128xf32>
    %208 = arith.mulf %192, %200 : vector<8x128xf32>
    %209 = arith.addf %207, %208 : vector<8x128xf32>
    %210 = math.tanh %209 : vector<8x128xf32>
    %211 = arith.mulf %206, %210 : vector<8x128xf32>
    %c7 = arith.constant 7 : index
    %c0_57 = arith.constant 0 : index
    %c0_58 = arith.constant 0 : index
    %212 = vector.load %arg0[%c7, %c0_57, %c0_58] : memref<8x8x512xf32, #tpu.memory_space<vmem>>, vector<1x8x512xf32>
    %213 = vector.shape_cast %212 : vector<1x8x512xf32> to vector<8x512xf32>
    %c0_59 = arith.constant 0 : index
    %c0_60 = arith.constant 0 : index
    %214 = vector.load %arg1[%c0_59, %c0_60] : memref<128x512xf32, #tpu.memory_space<vmem>>, vector<128x512xf32>
    %cst_61 = arith.constant dense<0.000000e+00> : vector<8x512xf32>
    %215 = tpu.matmul %211, %214, %cst_61 {dimension_numbers = #tpu.dot_dimension_numbers<[1], [0], [0], [1], [0, 0, 1, 1], [], []>} : vector<8x128xf32>, vector<128x512xf32>, vector<8x512xf32> -> vector<8x512xf32>
    %216 = arith.addf %213, %215 : vector<8x512xf32>
    %217 = vector.extract_strided_slice %216 {offsets = [0, 0], sizes = [8, 128], strides = [1, 1]} : vector<8x512xf32> to vector<8x128xf32>
    %218 = arith.negf %217 : vector<8x128xf32>
    %219 = math.exp %218 : vector<8x128xf32>
    %cst_62 = arith.constant 1.000000e+00 : f32
    %220 = vector.broadcast %cst_62 : f32 to vector<8x128xf32>
    %221 = arith.addf %220, %219 : vector<8x128xf32>
    %222 = arith.divf %220, %221 : vector<8x128xf32>
    %223 = vector.extract_strided_slice %216 {offsets = [0, 128], sizes = [8, 128], strides = [1, 1]} : vector<8x512xf32> to vector<8x128xf32>
    %224 = arith.negf %223 : vector<8x128xf32>
    %225 = math.exp %224 : vector<8x128xf32>
    %cst_63 = arith.constant 1.000000e+00 : f32
    %226 = vector.broadcast %cst_63 : f32 to vector<8x128xf32>
    %227 = arith.addf %226, %225 : vector<8x128xf32>
    %228 = arith.divf %226, %227 : vector<8x128xf32>
    %229 = vector.extract_strided_slice %216 {offsets = [0, 256], sizes = [8, 128], strides = [1, 1]} : vector<8x512xf32> to vector<8x128xf32>
    %230 = math.tanh %229 : vector<8x128xf32>
    %231 = vector.extract_strided_slice %216 {offsets = [0, 384], sizes = [8, 128], strides = [1, 1]} : vector<8x512xf32> to vector<8x128xf32>
    %232 = arith.negf %231 : vector<8x128xf32>
    %233 = math.exp %232 : vector<8x128xf32>
    %cst_64 = arith.constant 1.000000e+00 : f32
    %234 = vector.broadcast %cst_64 : f32 to vector<8x128xf32>
    %235 = arith.addf %234, %233 : vector<8x128xf32>
    %236 = arith.divf %234, %235 : vector<8x128xf32>
    %237 = arith.mulf %228, %209 : vector<8x128xf32>
    %238 = arith.mulf %222, %230 : vector<8x128xf32>
    %239 = arith.addf %237, %238 : vector<8x128xf32>
    %240 = math.tanh %239 : vector<8x128xf32>
    %241 = arith.mulf %236, %240 : vector<8x128xf32>
    %c0_65 = arith.constant 0 : index
    %c0_66 = arith.constant 0 : index
    %242 = vector.load %arg2[%c0_65, %c0_66] : memref<128x128xf32, #tpu.memory_space<vmem>>, vector<128x128xf32>
    %cst_67 = arith.constant dense<0.000000e+00> : vector<8x128xf32>
    %243 = tpu.matmul %241, %242, %cst_67 {dimension_numbers = #tpu.dot_dimension_numbers<[1], [0], [0], [1], [0, 0, 1, 1], [], []>} : vector<8x128xf32>, vector<128x128xf32>, vector<8x128xf32> -> vector<8x128xf32>
    %c0_68 = arith.constant 0 : index
    %c0_69 = arith.constant 0 : index
    %244 = vector.load %arg3[%c0_68, %c0_69] : memref<1x128xf32, #tpu.memory_space<vmem>>, vector<1x128xf32>
    %245 = vector.broadcast %244 : vector<1x128xf32> to vector<8x128xf32>
    %246 = arith.addf %243, %245 : vector<8x128xf32>
    %c0_70 = arith.constant 0 : index
    %c0_71 = arith.constant 0 : index
    %247 = vector.load %arg4[%c0_70, %c0_71] : memref<8x128xf32, #tpu.memory_space<vmem>>, vector<8x128xf32>
    tpu.vector_store %arg4[%c0_70, %c0_71], %246 {strides = array<i32>} : memref<8x128xf32, #tpu.memory_space<vmem>>, vector<8x128xf32>,
    return
  }
}

</mosaic_0001>

<llo_original>
// kernel: tpu_custom_call.1
$region0: #{tpu_custom_call.1}
  #allocation0 [shape = 'u32[]', space=smem, size = 0x4, offset = 0x4, fixed_abs, tag = 'smem constant byte address 0x4 - core index']
  #allocation1 [shape = 'u32[144,128]{1,0:T(1,128)}', space=vmem, size = 0x12000, scoped, tag = 'internal scratch']
  %s0 = inlined_call_operand.hbm [shape: f32[8,8,512], index: 0, kind: input, shape index: {}]
  %s1 = inlined_call_operand.hbm [shape: f32[128,512], index: 1, kind: input, shape index: {}]
  %s2 = inlined_call_operand.hbm [shape: f32[128,128], index: 2, kind: input, shape index: {}]
  %s3 = inlined_call_operand.vmem [shape: f32[1,128], index: 3, kind: input, shape index: {}]
  %s4 = inlined_call_operand.hbm [shape: f32[8,128], index: 4, kind: output, shape index: {}]
  %s5 = sld [smem:[#allocation0]]
  $region38: #{tpu_custom_call.1} parent=0
    _
  %s7 = ssub.s32 1, %s5
  %s8 = scalar_select 0, %s7, %s5
  $region1: #{tpu_custom_call.1} parent=0
    #allocation2 [shape = 'u8[131072]{0}', space=vmem, size = 0x20000, scoped, tag = 'input window, operand 0, single buffered']
    #allocation3 [shape = 's32[1]{0}', space=sflag, size = 0x4, scoped, tag = 'scoped memory for tpu_custom_call.1']
    #allocation4 [shape = 's32[1]{0}', space=sflag, size = 0x4, scoped, tag = 'scoped memory for tpu_custom_call.1']
    #allocation5 [shape = 'u8[262144]{0}', space=vmem, size = 0x40000, scoped, tag = 'input window, operand 1, single buffered']
    #allocation6 [shape = 's32[1]{0}', space=sflag, size = 0x4, scoped, tag = 'scoped memory for tpu_custom_call.1']
    #allocation7 [shape = 'u8[65536]{0}', space=vmem, size = 0x10000, scoped, tag = 'input window, operand 2, single buffered']
    #allocation8 [shape = 'u8[4096]{0}', space=vmem, size = 0x1000, scoped, tag = 'output window, operand 0, single buffered']
    %9 = vsyncpa [#allocation3], 0
    %10 = vsyncpa [#allocation6], 0
    %11 = vsyncpa [#allocation4], 0
    // Predicated region
    $region2: #{tpu_custom_call.1} parent=1 // pred_check
      _
    $region3: #{tpu_custom_call.1} parent=1 // pred_check_branch
      %13 = sbr.rel (0) target = $region5
    $region4: #{tpu_custom_call.1} parent=1 // pred_region
      %s15 = ssub.s32 4096, 4096
      %16 = vsyncadd [#allocation3], %s15
      %s17 = sshll.u32 [#allocation2], 4
      %s18 = int_to_ptr.vmem [resolvable:$true] %s17
      %23 = dma.hbm_to_vmem [thread:$0]  %s0, 4096, %s18, [#allocation3], 512, 512, 32
    $region5: #{tpu_custom_call.1} parent=1 // pred_fallthru
      _
    // Predicated region
    $region6: #{tpu_custom_call.1} parent=1 // pred_check
      _
    $region7: #{tpu_custom_call.1} parent=1 // pred_check_branch
      %25 = sbr.rel (0) target = $region9
    $region8: #{tpu_custom_call.1} parent=1 // pred_region
      %s27 = ssub.s32 8192, 8192
      %28 = vsyncadd [#allocation6], %s27
      %s29 = sshll.u32 [#allocation5], 4
      %s30 = int_to_ptr.vmem [resolvable:$true] %s29
      %35 = dma.hbm_to_vmem [thread:$0]  %s1, 8192, %s30, [#allocation6], 512, 512, 32
    $region9: #{tpu_custom_call.1} parent=1 // pred_fallthru
      _
    // Predicated region
    $region10: #{tpu_custom_call.1} parent=1 // pred_check
      _
    $region11: #{tpu_custom_call.1} parent=1 // pred_check_branch
      %37 = sbr.rel (0) target = $region13
    $region12: #{tpu_custom_call.1} parent=1 // pred_region
      %s39 = ssub.s32 2048, 2048
      %40 = vsyncadd [#allocation6], %s39
      %s41 = sshll.u32 [#allocation7], 4
      %s42 = int_to_ptr.vmem [resolvable:$true] %s41
      %47 = dma.hbm_to_vmem [thread:$0]  %s2, 2048, %s42, [#allocation6], 128, 128, 8
    $region13: #{tpu_custom_call.1} parent=1 // pred_fallthru
      _
    // Predicated region
    $region14: #{tpu_custom_call.1} parent=1 // pred_check
      _
    $region15: #{tpu_custom_call.1} parent=1 // pred_check_branch
      %49 = sbr.rel (0) target = $region17
    $region16: #{tpu_custom_call.1} parent=1 // pred_region
      _
    $region17: #{tpu_custom_call.1} parent=1 // pred_fallthru
      _
    // Predicated region
    $region18: #{tpu_custom_call.1} parent=1 // pred_check
      _
    $region19: #{tpu_custom_call.1} parent=1 // pred_check_branch
      %51 = sbr.rel (0) target = $region21
    $region20: #{tpu_custom_call.1} parent=1 // pred_region
      %52 = dma.done [#allocation3], 4096
    $region21: #{tpu_custom_call.1} parent=1 // pred_fallthru
      _
    // Predicated region
    $region22: #{tpu_custom_call.1} parent=1 // pred_check
      _
    $region23: #{tpu_custom_call.1} parent=1 // pred_check_branch
      %54 = sbr.rel (0) target = $region25
    $region24: #{tpu_custom_call.1} parent=1 // pred_region
      %55 = dma.done [#allocation6], 8192
    $region25: #{tpu_custom_call.1} parent=1 // pred_fallthru
      _
    // Predicated region
    $region26: #{tpu_custom_call.1} parent=1 // pred_check
      _
    $region27: #{tpu_custom_call.1} parent=1 // pred_check_branch
      %57 = sbr.rel (0) target = $region29
    $region28: #{tpu_custom_call.1} parent=1 // pred_region
      %58 = dma.done [#allocation6], 2048
    $region29: #{tpu_custom_call.1} parent=1 // pred_fallthru
      _
    %v59 = vld [vmem:[#allocation2] sm:$0xff]
    %v60 = vld [vmem:[#allocation2 + $0x8] sm:$0xff]
    %v61 = vld [vmem:[#allocation2 + $0x10] sm:$0xff]
    %v62 = vld [vmem:[#allocation2 + $0x18] sm:$0xff]
    %v63 = vld [vmem:[#allocation5] sm:$0xff]
    %v64 = vld [vmem:[#allocation5 + $0x8] sm:$0xff]
    %v65 = vld [vmem:[#allocation5 + $0x10] sm:$0xff]
    %v66 = vld [vmem:[#allocation5 + $0x18] sm:$0xff]
    %v67 = vld [vmem:[#allocation5 + $0x20] sm:$0xff]
    %v68 = vld [vmem:[#allocation5 + $0x28] sm:$0xff]
    %v69 = vld [vmem:[#allocation5 + $0x30] sm:$0xff]
    %v70 = vld [vmem:[#allocation5 + $0x38] sm:$0xff]
    %v71 = vld [vmem:[#allocation5 + $0x40] sm:$0xff]
    %v72 = vld [vmem:[#allocation5 + $0x48] sm:$0xff]
    %v73 = vld [vmem:[#allocation5 + $0x50] sm:$0xff]
    %v74 = vld [vmem:[#allocation5 + $0x58] sm:$0xff]
    %v75 = vld [vmem:[#allocation5 + $0x60] sm:$0xff]
    %v76 = vld [vmem:[#allocation5 + $0x68] sm:$0xff]
    %v77 = vld [vmem:[#allocation5 + $0x70] sm:$0xff]
    %v78 = vld [vmem:[#allocation5 + $0x78] sm:$0xff]
    %v79 = vld [vmem:[#allocation5 + $0x80] sm:$0xff]
    %v80 = vld [vmem:[#allocation5 + $0x88] sm:$0xff]
    %v81 = vld [vmem:[#allocation5 + $0x90] sm:$0xff]
    %v82 = vld [vmem:[#allocation5 + $0x98] sm:$0xff]
    %v83 = vld [vmem:[#allocation5 + $0xa0] sm:$0xff]
    %v84 = vld [vmem:[#allocation5 + $0xa8] sm:$0xff]
    %v85 = vld [vmem:[#allocation5 + $0xb0] sm:$0xff]
    %v86 = vld [vmem:[#allocation5 + $0xb8] sm:$0xff]
    %v87 = vld [vmem:[#allocation5 + $0xc0] sm:$0xff]
    %v88 = vld [vmem:[#allocation5 + $0xc8] sm:$0xff]
    %v89 = vld [vmem:[#allocation5 + $0xd0] sm:$0xff]
    %v90 = vld [vmem:[#allocation5 + $0xd8] sm:$0xff]
    %v91 = vld [vmem:[#allocation5 + $0xe0] sm:$0xff]
    %v92 = vld [vmem:[#allocation5 + $0xe8] sm:$0xff]
    %v93 = vld [vmem:[#allocation5 + $0xf0] sm:$0xff]
    %v94 = vld [vmem:[#allocation5 + $0xf8] sm:$0xff]
    %v95 = vld [vmem:[#allocation5 + $0x100] sm:$0xff]
    %v96 = vld [vmem:[#allocation5 + $0x108] sm:$0xff]
    %v97 = vld [vmem:[#allocation5 + $0x110] sm:$0xff]
    %v98 = vld [vmem:[#allocation5 + $0x118] sm:$0xff]
    %v99 = vld [vmem:[#allocation5 + $0x120] sm:$0xff]
    %v100 = vld [vmem:[#allocation5 + $0x128] sm:$0xff]
    %v101 = vld [vmem:[#allocation5 + $0x130] sm:$0xff]
    %v102 = vld [vmem:[#allocation5 + $0x138] sm:$0xff]
    %v103 = vld [vmem:[#allocation5 + $0x140] sm:$0xff]
    %v104 = vld [vmem:[#allocation5 + $0x148] sm:$0xff]
    %v105 = vld [vmem:[#allocation5 + $0x150] sm:$0xff]
    %v106 = vld [vmem:[#allocation5 + $0x158] sm:$0xff]
    %v107 = vld [vmem:[#allocation5 + $0x160] sm:$0xff]
    %v108 = vld [vmem:[#allocation5 + $0x168] sm:$0xff]
    %v109 = vld [vmem:[#allocation5 + $0x170] sm:$0xff]
    %v110 = vld [vmem:[#allocation5 + $0x178] sm:$0xff]
    %v111 = vld [vmem:[#allocation5 + $0x180] sm:$0xff]
    %v112 = vld [vmem:[#allocation5 + $0x188] sm:$0xff]
    %v113 = vld [vmem:[#allocation5 + $0x190] sm:$0xff]
    %v114 = vld [vmem:[#allocation5 + $0x198] sm:$0xff]
    %v115 = vld [vmem:[#allocation5 + $0x1a0] sm:$0xff]
    %v116 = vld [vmem:[#allocation5 + $0x1a8] sm:$0xff]
    %v117 = vld [vmem:[#allocation5 + $0x1b0] sm:$0xff]
    %v118 = vld [vmem:[#allocation5 + $0x1b8] sm:$0xff]
    %v119 = vld [vmem:[#allocation5 + $0x1c0] sm:$0xff]
    %v120 = vld [vmem:[#allocation5 + $0x1c8] sm:$0xff]
    %v121 = vld [vmem:[#allocation5 + $0x1d0] sm:$0xff]
    %v122 = vld [vmem:[#allocation5 + $0x1d8] sm:$0xff]
    %v123 = vld [vmem:[#allocation5 + $0x1e0] sm:$0xff]
    %v124 = vld [vmem:[#allocation5 + $0x1e8] sm:$0xff]
    %v125 = vld [vmem:[#allocation5 + $0x1f0] sm:$0xff]
    %v126 = vld [vmem:[#allocation5 + $0x1f8] sm:$0xff]
    %127 = vmatprep.subr.mxu0 %v64
    %128 = vmatpush1.msra.mxu0 %v63
    %129 = vmatprep.subr.mxu0 %v68
    %130 = vmatpush1.msra.mxu0 %v67
    %131 = vmatprep.subr.mxu0 %v72
    %132 = vmatpush1.msra.mxu0 %v71
    %133 = vmatprep.subr.mxu0 %v76
    %134 = vmatpush1.msra.mxu0 %v75
    %135 = vmatprep.subr.mxu0 %v80
    %136 = vmatpush1.msra.mxu0 %v79
    %137 = vmatprep.subr.mxu0 %v84
    %138 = vmatpush1.msra.mxu0 %v83
    %139 = vmatprep.subr.mxu0 %v88
    %140 = vmatpush1.msra.mxu0 %v87
    %141 = vmatprep.subr.mxu0 %v92
    %142 = vmatpush1.msra.mxu0 %v91
    %143 = vmatprep.subr.mxu0 %v96
    %144 = vmatpush1.msra.mxu0 %v95
    %145 = vmatprep.subr.mxu0 %v100
    %146 = vmatpush1.msra.mxu0 %v99
    %147 = vmatprep.subr.mxu0 %v104
    %148 = vmatpush1.msra.mxu0 %v103
    %149 = vmatprep.subr.mxu0 %v108
    %150 = vmatpush1.msra.mxu0 %v107
    %151 = vmatprep.subr.mxu0 %v112
    %152 = vmatpush1.msra.mxu0 %v111
    %153 = vmatprep.subr.mxu0 %v116
    %154 = vmatpush1.msra.mxu0 %v115
    %155 = vmatprep.subr.mxu0 %v120
    %156 = vmatpush1.msra.mxu0 %v119
    %157 = vmatprep.subr.mxu0 %v124
    %158 = vmatpush1.msra.mxu0 %v123
    %159 = vmatprep.subr.mxu0 0.0
    %160 = vmatpush1.msra.mxu0 0.0
    %161 = vmatprep.subr.mxu0 0.0
    %162 = vmatpush1.msra.mxu0 0.0
    %163 = vmatprep.subr.mxu0 0.0
    %164 = vmatpush1.msra.mxu0 0.0
    %165 = vmatprep.subr.mxu0 0.0
    %166 = vmatpush1.msra.mxu0 0.0
    %167 = vmatprep.subr.mxu0 0.0
    %168 = vmatpush1.msra.mxu0 0.0
    %169 = vmatprep.subr.mxu0 0.0
    %170 = vmatpush1.msra.mxu0 0.0
    %171 = vmatprep.subr.mxu0 0.0
    %172 = vmatpush1.msra.mxu0 0.0
    %173 = vmatprep.subr.mxu0 0.0
    %174 = vmatpush1.msra.mxu0 0.0
    %175 = vmatprep.subr.mxu0 0.0
    %176 = vmatpush1.msra.mxu0 0.0
    %177 = vmatprep.subr.mxu0 0.0
    %178 = vmatpush1.msra.mxu0 0.0
    %179 = vmatprep.subr.mxu0 0.0
    %180 = vmatpush1.msra.mxu0 0.0
    %181 = vmatprep.subr.mxu0 0.0
    %182 = vmatpush1.msra.mxu0 0.0
    %183 = vmatprep.subr.mxu0 0.0
    %184 = vmatpush1.msra.mxu0 0.0
    %185 = vmatprep.subr.mxu0 0.0
    %186 = vmatpush1.msra.mxu0 0.0
    %187 = vmatprep.subr.mxu0 0.0
    %188 = vmatpush1.msra.mxu0 0.0
    %189 = vmatprep.subr.mxu0 0.0
    %190 = vmatpush1.msra.mxu0 0.0
    %191 = vmatprep.mubr.f32.mxu0 0.0
    %192 = vmatmul.mubr.f32.gmra.mrb[0].mxu0 0.0
    %v193 = vpop.f32.mrb[0].mxu0
    %v194 = vadd.f32 0.0, %v193
    %v195 = vpop.f32.mrb[0].mxu0
    %v196 = vadd.f32 0.0, %v195
    %197 = vdwg.mxu0
    %198 = vmatprep.subr.mxu0 %v66
    %199 = vmatpush1.msra.mxu0 %v65
    %200 = vmatprep.subr.mxu0 %v70
    %201 = vmatpush1.msra.mxu0 %v69
    %202 = vmatprep.subr.mxu0 %v74
    %203 = vmatpush1.msra.mxu0 %v73
    %204 = vmatprep.subr.mxu0 %v78
    %205 = vmatpush1.msra.mxu0 %v77
    %206 = vmatprep.subr.mxu0 %v82
    %207 = vmatpush1.msra.mxu0 %v81
    %208 = vmatprep.subr.mxu0 %v86
    %209 = vmatpush1.msra.mxu0 %v85
    %210 = vmatprep.subr.mxu0 %v90
    %211 = vmatpush1.msra.mxu0 %v89
    %212 = vmatprep.subr.mxu0 %v94
    %213 = vmatpush1.msra.mxu0 %v93
    %214 = vmatprep.subr.mxu0 %v98
    %215 = vmatpush1.msra.mxu0 %v97
    %216 = vmatprep.subr.mxu0 %v102
    %217 = vmatpush1.msra.mxu0 %v101
    %218 = vmatprep.subr.mxu0 %v106
    %219 = vmatpush1.msra.mxu0 %v105
    %220 = vmatprep.subr.mxu0 %v110
    %221 = vmatpush1.msra.mxu0 %v109
    %222 = vmatprep.subr.mxu0 %v114
    %223 = vmatpush1.msra.mxu0 %v113
    %224 = vmatprep.subr.mxu0 %v118
    %225 = vmatpush1.msra.mxu0 %v117
    %226 = vmatprep.subr.mxu0 %v122
    %227 = vmatpush1.msra.mxu0 %v121
    %228 = vmatprep.subr.mxu0 %v126
    %229 = vmatpush1.msra.mxu0 %v125
    %230 = vmatprep.subr.mxu0 0.0
    %231 = vmatpush1.msra.mxu0 0.0
    %232 = vmatprep.subr.mxu0 0.0
    %233 = vmatpush1.msra.mxu0 0.0
    %234 = vmatprep.subr.mxu0 0.0
    %235 = vmatpush1.msra.mxu0 0.0
    %236 = vmatprep.subr.mxu0 0.0
    %237 = vmatpush1.msra.mxu0 0.0
    %238 = vmatprep.subr.mxu0 0.0
    %239 = vmatpush1.msra.mxu0 0.0
    %240 = vmatprep.subr.mxu0 0.0
    %241 = vmatpush1.msra.mxu0 0.0
    %242 = vmatprep.subr.mxu0 0.0
    %243 = vmatpush1.msra.mxu0 0.0
    %244 = vmatprep.subr.mxu0 0.0
    %245 = vmatpush1.msra.mxu0 0.0
    %246 = vmatprep.subr.mxu0 0.0
    %247 = vmatpush1.msra.mxu0 0.0
    %248 = vmatprep.subr.mxu0 0.0
    %249 = vmatpush1.msra.mxu0 0.0
    %250 = vmatprep.subr.mxu0 0.0
    %251 = vmatpush1.msra.mxu0 0.0
    %252 = vmatprep.subr.mxu0 0.0
    %253 = vmatpush1.msra.mxu0 0.0
    %254 = vmatprep.subr.mxu0 0.0
    %255 = vmatpush1.msra.mxu0 0.0
    %256 = vmatprep.subr.mxu0 0.0
    %257 = vmatpush1.msra.mxu0 0.0
    %258 = vmatprep.subr.mxu0 0.0
    %259 = vmatpush1.msra.mxu0 0.0
    %260 = vmatprep.subr.mxu0 0.0
    %261 = vmatpush1.msra.mxu0 0.0
    %262 = vmatprep.mubr.f32.mxu0 0.0
    %263 = vmatmul.mubr.f32.gmra.mrb[0].mxu0 0.0
    %v264 = vpop.f32.mrb[0].mxu0
    %v265 = vadd.f32 0.0, %v264
    %v266 = vpop.f32.mrb[0].mxu0
    %v267 = vadd.f32 0.0, %v266
    %268 = vdwg.mxu0
    %v269 = vadd.f32 %v59, %v194
    %v270 = vadd.f32 %v60, %v196
    %v271 = vadd.f32 %v61, %v265
    %v272 = vadd.f32 %v62, %v267
    %v273 = vxor.u32 %v269, 2147483648
    %v274 = vmul.f32 %v273, 1.442695
    %v275 = vpow.pop %v274
    %v276 = vadd.f32 %v275, 1.0
    %v277 = vrcp.pop %v276
    %v278 = vmul.f32 1.0, %v277
    %v279 = vxor.u32 %v270, 2147483648
    %v280 = vmul.f32 %v279, 1.442695
    %v281 = vpow.pop %v280
    %v282 = vadd.f32 %v281, 1.0
    %v283 = vrcp.pop %v282
    %v284 = vmul.f32 1.0, %v283
    %v285 = vtanh.pop %v271
    %v286 = vxor.u32 %v272, 2147483648
    %v287 = vmul.f32 %v286, 1.442695
    %v288 = vpow.pop %v287
    %v289 = vadd.f32 %v288, 1.0
    %v290 = vrcp.pop %v289
    %v291 = vmul.f32 1.0, %v290
    %v292 = vmul.f32 %v284, 0.0
    %v293 = vmul.f32 %v278, %v285
    %v294 = vadd.f32 %v292, %v293
    %v295 = vtanh.pop %v294
    %v296 = vmul.f32 %v291, %v295
    %s297 = scalar_lea.vmem [#allocation2], 32
    %v298 = vld [vmem:[%s297] sm:$0xff]
    %v299 = vld [vmem:[%s297 + $0x8] sm:$0xff]
    %v300 = vld [vmem:[%s297 + $0x10] sm:$0xff]
    %v301 = vld [vmem:[%s297 + $0x18] sm:$0xff]
    %302 = vmatprep.subr.mxu0 %v64
    %303 = vmatpush1.msra.mxu0 %v63
    %304 = vmatprep.subr.mxu0 %v68
    %305 = vmatpush1.msra.mxu0 %v67
    %306 = vmatprep.subr.mxu0 %v72
    %307 = vmatpush1.msra.mxu0 %v71
    %308 = vmatprep.subr.mxu0 %v76
    %309 = vmatpush1.msra.mxu0 %v75
    %310 = vmatprep.subr.mxu0 %v80
    %311 = vmatpush1.msra.mxu0 %v79
    %312 = vmatprep.subr.mxu0 %v84
    %313 = vmatpush1.msra.mxu0 %v83
    %314 = vmatprep.subr.mxu0 %v88
    %315 = vmatpush1.msra.mxu0 %v87
    %316 = vmatprep.subr.mxu0 %v92
    %317 = vmatpush1.msra.mxu0 %v91
    %318 = vmatprep.subr.mxu0 %v96
    %319 = vmatpush1.msra.mxu0 %v95
    %320 = vmatprep.subr.mxu0 %v100
    %321 = vmatpush1.msra.mxu0 %v99
    %322 = vmatprep.subr.mxu0 %v104
    %323 = vmatpush1.msra.mxu0 %v103
    %324 = vmatprep.subr.mxu0 %v108
    %325 = vmatpush1.msra.mxu0 %v107
    %326 = vmatprep.subr.mxu0 %v112
    %327 = vmatpush1.msra.mxu0 %v111
    %328 = vmatprep.subr.mxu0 %v116
    %329 = vmatpush1.msra.mxu0 %v115
    %330 = vmatprep.subr.mxu0 %v120
    %331 = vmatpush1.msra.mxu0 %v119
    %332 = vmatprep.subr.mxu0 %v124
    %333 = vmatpush1.msra.mxu0 %v123
    %334 = vmatprep.subr.mxu0 0.0
    %335 = vmatpush1.msra.mxu0 0.0
    %336 = vmatprep.subr.mxu0 0.0
    %337 = vmatpush1.msra.mxu0 0.0
    %338 = vmatprep.subr.mxu0 0.0
    %339 = vmatpush1.msra.mxu0 0.0
    %340 = vmatprep.subr.mxu0 0.0
    %341 = vmatpush1.msra.mxu0 0.0
    %342 = vmatprep.subr.mxu0 0.0
    %343 = vmatpush1.msra.mxu0 0.0
    %344 = vmatprep.subr.mxu0 0.0
    %345 = vmatpush1.msra.mxu0 0.0
    %346 = vmatprep.subr.mxu0 0.0
    %347 = vmatpush1.msra.mxu0 0.0
    %348 = vmatprep.subr.mxu0 0.0
    %349 = vmatpush1.msra.mxu0 0.0
    %350 = vmatprep.subr.mxu0 0.0
    %351 = vmatpush1.msra.mxu0 0.0
    %352 = vmatprep.subr.mxu0 0.0
    %353 = vmatpush1.msra.mxu0 0.0
    %354 = vmatprep.subr.mxu0 0.0
    %355 = vmatpush1.msra.mxu0 0.0
    %356 = vmatprep.subr.mxu0 0.0
    %357 = vmatpush1.msra.mxu0 0.0
    %358 = vmatprep.subr.mxu0 0.0
    %359 = vmatpush1.msra.mxu0 0.0
    %360 = vmatprep.subr.mxu0 0.0
    %361 = vmatpush1.msra.mxu0 0.0
    %362 = vmatprep.subr.mxu0 0.0
    %363 = vmatpush1.msra.mxu0 0.0
    %364 = vmatprep.subr.mxu0 0.0
    %365 = vmatpush1.msra.mxu0 0.0
    %366 = vmatprep.mubr.f32.mxu0 0.0
    %367 = vmatmul.mubr.f32.gmra.mrb[0].mxu0 %v296
    %v368 = vpop.f32.mrb[0].mxu0
    %v369 = vadd.f32 0.0, %v368
    %v370 = vpop.f32.mrb[0].mxu0
    %v371 = vadd.f32 0.0, %v370
    %372 = vdwg.mxu0
    %373 = vmatprep.subr.mxu0 %v66
    %374 = vmatpush1.msra.mxu0 %v65
    %375 = vmatprep.subr.mxu0 %v70
    %376 = vmatpush1.msra.mxu0 %v69
    %377 = vmatprep.subr.mxu0 %v74
    %378 = vmatpush1.msra.mxu0 %v73
    %379 = vmatprep.subr.mxu0 %v78
    %380 = vmatpush1.msra.mxu0 %v77
    %381 = vmatprep.subr.mxu0 %v82
    %382 = vmatpush1.msra.mxu0 %v81
    %383 = vmatprep.subr.mxu0 %v86
    %384 = vmatpush1.msra.mxu0 %v85
    %385 = vmatprep.subr.mxu0 %v90
    %386 = vmatpush1.msra.mxu0 %v89
    %387 = vmatprep.subr.mxu0 %v94
    %388 = vmatpush1.msra.mxu0 %v93
    %389 = vmatprep.subr.mxu0 %v98
    %390 = vmatpush1.msra.mxu0 %v97
    %391 = vmatprep.subr.mxu0 %v102
    %392 = vmatpush1.msra.mxu0 %v101
    %393 = vmatprep.subr.mxu0 %v106
    %394 = vmatpush1.msra.mxu0 %v105
    %395 = vmatprep.subr.mxu0 %v110
    %396 = vmatpush1.msra.mxu0 %v109
    %397 = vmatprep.subr.mxu0 %v114
    %398 = vmatpush1.msra.mxu0 %v113
    %399 = vmatprep.subr.mxu0 %v118
    %400 = vmatpush1.msra.mxu0 %v117
    %401 = vmatprep.subr.mxu0 %v122
    %402 = vmatpush1.msra.mxu0 %v121
    %403 = vmatprep.subr.mxu0 %v126
    %404 = vmatpush1.msra.mxu0 %v125
    %405 = vmatprep.subr.mxu0 0.0
    %406 = vmatpush1.msra.mxu0 0.0
    %407 = vmatprep.subr.mxu0 0.0
    %408 = vmatpush1.msra.mxu0 0.0
    %409 = vmatprep.subr.mxu0 0.0
    %410 = vmatpush1.msra.mxu0 0.0
    %411 = vmatprep.subr.mxu0 0.0
    %412 = vmatpush1.msra.mxu0 0.0
    %413 = vmatprep.subr.mxu0 0.0
    %414 = vmatpush1.msra.mxu0 0.0
    %415 = vmatprep.subr.mxu0 0.0
    %416 = vmatpush1.msra.mxu0 0.0
    %417 = vmatprep.subr.mxu0 0.0
    %418 = vmatpush1.msra.mxu0 0.0
    %419 = vmatprep.subr.mxu0 0.0
    %420 = vmatpush1.msra.mxu0 0.0
    %421 = vmatprep.subr.mxu0 0.0
    %422 = vmatpush1.msra.mxu0 0.0
    %423 = vmatprep.subr.mxu0 0.0
    %424 = vmatpush1.msra.mxu0 0.0
    %425 = vmatprep.subr.mxu0 0.0
    %426 = vmatpush1.msra.mxu0 0.0
    %427 = vmatprep.subr.mxu0 0.0
    %428 = vmatpush1.msra.mxu0 0.0
    %429 = vmatprep.subr.mxu0 0.0
    %430 = vmatpush1.msra.mxu0 0.0
    %431 = vmatprep.subr.mxu0 0.0
    %432 = vmatpush1.msra.mxu0 0.0
    %433 = vmatprep.subr.mxu0 0.0
    %434 = vmatpush1.msra.mxu0 0.0
    %435 = vmatprep.subr.mxu0 0.0
    %436 = vmatpush1.msra.mxu0 0.0
    %437 = vmatprep.mubr.f32.mxu0 0.0
    %438 = vmatmul.mubr.f32.gmra.mrb[0].mxu0 %v296
    %v439 = vpop.f32.mrb[0].mxu0
    %v440 = vadd.f32 0.0, %v439
    %v441 = vpop.f32.mrb[0].mxu0
    %v442 = vadd.f32 0.0, %v441
    %443 = vdwg.mxu0
    %v444 = vadd.f32 %v298, %v369
    %v445 = vadd.f32 %v299, %v371
    %v446 = vadd.f32 %v300, %v440
    %v447 = vadd.f32 %v301, %v442
    %v448 = vxor.u32 %v444, 2147483648
    %v449 = vmul.f32 %v448, 1.442695
    %v450 = vpow.pop %v449
    %v451 = vadd.f32 %v450, 1.0
    %v452 = vrcp.pop %v451
    %v453 = vmul.f32 1.0, %v452
    %v454 = vxor.u32 %v445, 2147483648
    %v455 = vmul.f32 %v454, 1.442695
    %v456 = vpow.pop %v455
    %v457 = vadd.f32 %v456, 1.0
    %v458 = vrcp.pop %v457
    %v459 = vmul.f32 1.0, %v458
    %v460 = vtanh.pop %v446
    %v461 = vxor.u32 %v447, 2147483648
    %v462 = vmul.f32 %v461, 1.442695
    %v463 = vpow.pop %v462
    %v464 = vadd.f32 %v463, 1.0
    %v465 = vrcp.pop %v464
    %v466 = vmul.f32 1.0, %v465
    %v467 = vmul.f32 %v459, %v294
    %v468 = vmul.f32 %v453, %v460
    %v469 = vadd.f32 %v467, %v468
    %v470 = vtanh.pop %v469
    %v471 = vmul.f32 %v466, %v470
    %s472 = scalar_lea.vmem [#allocation2], 64
    %v473 = vld [vmem:[%s472] sm:$0xff]
    %v474 = vld [vmem:[%s472 + $0x8] sm:$0xff]
    %v475 = vld [vmem:[%s472 + $0x10] sm:$0xff]
    %v476 = vld [vmem:[%s472 + $0x18] sm:$0xff]
    %477 = vmatprep.subr.mxu0 %v64
    %478 = vmatpush1.msra.mxu0 %v63
    %479 = vmatprep.subr.mxu0 %v68
    %480 = vmatpush1.msra.mxu0 %v67
    %481 = vmatprep.subr.mxu0 %v72
    %482 = vmatpush1.msra.mxu0 %v71
    %483 = vmatprep.subr.mxu0 %v76
    %484 = vmatpush1.msra.mxu0 %v75
    %485 = vmatprep.subr.mxu0 %v80
    %486 = vmatpush1.msra.mxu0 %v79
    %487 = vmatprep.subr.mxu0 %v84
    %488 = vmatpush1.msra.mxu0 %v83
    %489 = vmatprep.subr.mxu0 %v88
    %490 = vmatpush1.msra.mxu0 %v87
    %491 = vmatprep.subr.mxu0 %v92
    %492 = vmatpush1.msra.mxu0 %v91
    %493 = vmatprep.subr.mxu0 %v96
    %494 = vmatpush1.msra.mxu0 %v95
    %495 = vmatprep.subr.mxu0 %v100
    %496 = vmatpush1.msra.mxu0 %v99
    %497 = vmatprep.subr.mxu0 %v104
    %498 = vmatpush1.msra.mxu0 %v103
    %499 = vmatprep.subr.mxu0 %v108
    %500 = vmatpush1.msra.mxu0 %v107
    %501 = vmatprep.subr.mxu0 %v112
    %502 = vmatpush1.msra.mxu0 %v111
    %503 = vmatprep.subr.mxu0 %v116
    %504 = vmatpush1.msra.mxu0 %v115
    %505 = vmatprep.subr.mxu0 %v120
    %506 = vmatpush1.msra.mxu0 %v119
    %507 = vmatprep.subr.mxu0 %v124
    %508 = vmatpush1.msra.mxu0 %v123
    %509 = vmatprep.subr.mxu0 0.0
    %510 = vmatpush1.msra.mxu0 0.0
    %511 = vmatprep.subr.mxu0 0.0
    %512 = vmatpush1.msra.mxu0 0.0
    %513 = vmatprep.subr.mxu0 0.0
    %514 = vmatpush1.msra.mxu0 0.0
    %515 = vmatprep.subr.mxu0 0.0
    %516 = vmatpush1.msra.mxu0 0.0
    %517 = vmatprep.subr.mxu0 0.0
    %518 = vmatpush1.msra.mxu0 0.0
    %519 = vmatprep.subr.mxu0 0.0
    %520 = vmatpush1.msra.mxu0 0.0
    %521 = vmatprep.subr.mxu0 0.0
    %522 = vmatpush1.msra.mxu0 0.0
    %523 = vmatprep.subr.mxu0 0.0
    %524 = vmatpush1.msra.mxu0 0.0
    %525 = vmatprep.subr.mxu0 0.0
    %526 = vmatpush1.msra.mxu0 0.0
    %527 = vmatprep.subr.mxu0 0.0
    %528 = vmatpush1.msra.mxu0 0.0
    %529 = vmatprep.subr.mxu0 0.0
    %530 = vmatpush1.msra.mxu0 0.0
    %531 = vmatprep.subr.mxu0 0.0
    %532 = vmatpush1.msra.mxu0 0.0
    %533 = vmatprep.subr.mxu0 0.0
    %534 = vmatpush1.msra.mxu0 0.0
    %535 = vmatprep.subr.mxu0 0.0
    %536 = vmatpush1.msra.mxu0 0.0
    %537 = vmatprep.subr.mxu0 0.0
    %538 = vmatpush1.msra.mxu0 0.0
    %539 = vmatprep.subr.mxu0 0.0
    %540 = vmatpush1.msra.mxu0 0.0
    %541 = vmatprep.mubr.f32.mxu0 0.0
    %542 = vmatmul.mubr.f32.gmra.mrb[0].mxu0 %v471
    %v543 = vpop.f32.mrb[0].mxu0
    %v544 = vadd.f32 0.0, %v543
    %v545 = vpop.f32.mrb[0].mxu0
    %v546 = vadd.f32 0.0, %v545
    %547 = vdwg.mxu0
    %548 = vmatprep.subr.mxu0 %v66
    %549 = vmatpush1.msra.mxu0 %v65
    %550 = vmatprep.subr.mxu0 %v70
    %551 = vmatpush1.msra.mxu0 %v69
    %552 = vmatprep.subr.mxu0 %v74
    %553 = vmatpush1.msra.mxu0 %v73
    %554 = vmatprep.subr.mxu0 %v78
    %555 = vmatpush1.msra.mxu0 %v77
    %556 = vmatprep.subr.mxu0 %v82
    %557 = vmatpush1.msra.mxu0 %v81
    %558 = vmatprep.subr.mxu0 %v86
    %559 = vmatpush1.msra.mxu0 %v85
    %560 = vmatprep.subr.mxu0 %v90
    %561 = vmatpush1.msra.mxu0 %v89
    %562 = vmatprep.subr.mxu0 %v94
    %563 = vmatpush1.msra.mxu0 %v93
    %564 = vmatprep.subr.mxu0 %v98
    %565 = vmatpush1.msra.mxu0 %v97
    %566 = vmatprep.subr.mxu0 %v102
    %567 = vmatpush1.msra.mxu0 %v101
    %568 = vmatprep.subr.mxu0 %v106
    %569 = vmatpush1.msra.mxu0 %v105
    %570 = vmatprep.subr.mxu0 %v110
    %571 = vmatpush1.msra.mxu0 %v109
    %572 = vmatprep.subr.mxu0 %v114
    %573 = vmatpush1.msra.mxu0 %v113
    %574 = vmatprep.subr.mxu0 %v118
    %575 = vmatpush1.msra.mxu0 %v117
    %576 = vmatprep.subr.mxu0 %v122
    %577 = vmatpush1.msra.mxu0 %v121
    %578 = vmatprep.subr.mxu0 %v126
    %579 = vmatpush1.msra.mxu0 %v125
    %580 = vmatprep.subr.mxu0 0.0
    %581 = vmatpush1.msra.mxu0 0.0
    %582 = vmatprep.subr.mxu0 0.0
    %583 = vmatpush1.msra.mxu0 0.0
    %584 = vmatprep.subr.mxu0 0.0
    %585 = vmatpush1.msra.mxu0 0.0
    %586 = vmatprep.subr.mxu0 0.0
    %587 = vmatpush1.msra.mxu0 0.0
    %588 = vmatprep.subr.mxu0 0.0
    %589 = vmatpush1.msra.mxu0 0.0
    %590 = vmatprep.subr.mxu0 0.0
    %591 = vmatpush1.msra.mxu0 0.0
    %592 = vmatprep.subr.mxu0 0.0
    %593 = vmatpush1.msra.mxu0 0.0
    %594 = vmatprep.subr.mxu0 0.0
    %595 = vmatpush1.msra.mxu0 0.0
    %596 = vmatprep.subr.mxu0 0.0
    %597 = vmatpush1.msra.mxu0 0.0
    %598 = vmatprep.subr.mxu0 0.0
    %599 = vmatpush1.msra.mxu0 0.0
    %600 = vmatprep.subr.mxu0 0.0
    %601 = vmatpush1.msra.mxu0 0.0
    %602 = vmatprep.subr.mxu0 0.0
    %603 = vmatpush1.msra.mxu0 0.0
    %604 = vmatprep.subr.mxu0 0.0
    %605 = vmatpush1.msra.mxu0 0.0
    %606 = vmatprep.subr.mxu0 0.0
    %607 = vmatpush1.msra.mxu0 0.0
    %608 = vmatprep.subr.mxu0 0.0
    %609 = vmatpush1.msra.mxu0 0.0
    %610 = vmatprep.subr.mxu0 0.0
    %611 = vmatpush1.msra.mxu0 0.0
    %612 = vmatprep.mubr.f32.mxu0 0.0
    %613 = vmatmul.mubr.f32.gmra.mrb[0].mxu0 %v471
    %v614 = vpop.f32.mrb[0].mxu0
    %v615 = vadd.f32 0.0, %v614
    %v616 = vpop.f32.mrb[0].mxu0
    %v617 = vadd.f32 0.0, %v616
    %618 = vdwg.mxu0
    %v619 = vadd.f32 %v473, %v544
    %v620 = vadd.f32 %v474, %v546
    %v621 = vadd.f32 %v475, %v615
    %v622 = vadd.f32 %v476, %v617
    %v623 = vxor.u32 %v619, 2147483648
    %v624 = vmul.f32 %v623, 1.442695
    %v625 = vpow.pop %v624
    %v626 = vadd.f32 %v625, 1.0
    %v627 = vrcp.pop %v626
    %v628 = vmul.f32 1.0, %v627
    %v629 = vxor.u32 %v620, 2147483648
    %v630 = vmul.f32 %v629, 1.442695
    %v631 = vpow.pop %v630
    %v632 = vadd.f32 %v631, 1.0
    %v633 = vrcp.pop %v632
    %v634 = vmul.f32 1.0, %v633
    %v635 = vtanh.pop %v621
    %v636 = vxor.u32 %v622, 2147483648
    %v637 = vmul.f32 %v636, 1.442695
    %v638 = vpow.pop %v637
    %v639 = vadd.f32 %v638, 1.0
    %v640 = vrcp.pop %v639
    %v641 = vmul.f32 1.0, %v640
    %v642 = vmul.f32 %v634, %v469
    %v643 = vmul.f32 %v628, %v635
    %v644 = vadd.f32 %v642, %v643
    %v645 = vtanh.pop %v644
    %v646 = vmul.f32 %v641, %v645
    %s647 = scalar_lea.vmem [#allocation2], 96
    %v648 = vld [vmem:[%s647] sm:$0xff]
    %v649 = vld [vmem:[%s647 + $0x8] sm:$0xff]
    %v650 = vld [vmem:[%s647 + $0x10] sm:$0xff]
    %v651 = vld [vmem:[%s647 + $0x18] sm:$0xff]
    %652 = vmatprep.subr.mxu0 %v64
    %653 = vmatpush1.msra.mxu0 %v63
    %654 = vmatprep.subr.mxu0 %v68
    %655 = vmatpush1.msra.mxu0 %v67
    %656 = vmatprep.subr.mxu0 %v72
    %657 = vmatpush1.msra.mxu0 %v71
    %658 = vmatprep.subr.mxu0 %v76
    %659 = vmatpush1.msra.mxu0 %v75
    %660 = vmatprep.subr.mxu0 %v80
    %661 = vmatpush1.msra.mxu0 %v79
    %662 = vmatprep.subr.mxu0 %v84
    %663 = vmatpush1.msra.mxu0 %v83
    %664 = vmatprep.subr.mxu0 %v88
    %665 = vmatpush1.msra.mxu0 %v87
    %666 = vmatprep.subr.mxu0 %v92
    %667 = vmatpush1.msra.mxu0 %v91
    %668 = vmatprep.subr.mxu0 %v96
    %669 = vmatpush1.msra.mxu0 %v95
    %670 = vmatprep.subr.mxu0 %v100
    %671 = vmatpush1.msra.mxu0 %v99
    %672 = vmatprep.subr.mxu0 %v104
    %673 = vmatpush1.msra.mxu0 %v103
    %674 = vmatprep.subr.mxu0 %v108
    %675 = vmatpush1.msra.mxu0 %v107
    %676 = vmatprep.subr.mxu0 %v112
    %677 = vmatpush1.msra.mxu0 %v111
    %678 = vmatprep.subr.mxu0 %v116
    %679 = vmatpush1.msra.mxu0 %v115
    %680 = vmatprep.subr.mxu0 %v120
    %681 = vmatpush1.msra.mxu0 %v119
    %682 = vmatprep.subr.mxu0 %v124
    %683 = vmatpush1.msra.mxu0 %v123
    %684 = vmatprep.subr.mxu0 0.0
    %685 = vmatpush1.msra.mxu0 0.0
    %686 = vmatprep.subr.mxu0 0.0
    %687 = vmatpush1.msra.mxu0 0.0
    %688 = vmatprep.subr.mxu0 0.0
    %689 = vmatpush1.msra.mxu0 0.0
    %690 = vmatprep.subr.mxu0 0.0
    %691 = vmatpush1.msra.mxu0 0.0
    %692 = vmatprep.subr.mxu0 0.0
    %693 = vmatpush1.msra.mxu0 0.0
    %694 = vmatprep.subr.mxu0 0.0
    %695 = vmatpush1.msra.mxu0 0.0
    %696 = vmatprep.subr.mxu0 0.0
    %697 = vmatpush1.msra.mxu0 0.0
    %698 = vmatprep.subr.mxu0 0.0
    %699 = vmatpush1.msra.mxu0 0.0
    %700 = vmatprep.subr.mxu0 0.0
    %701 = vmatpush1.msra.mxu0 0.0
    %702 = vmatprep.subr.mxu0 0.0
    %703 = vmatpush1.msra.mxu0 0.0
    %704 = vmatprep.subr.mxu0 0.0
    %705 = vmatpush1.msra.mxu0 0.0
    %706 = vmatprep.subr.mxu0 0.0
    %707 = vmatpush1.msra.mxu0 0.0
    %708 = vmatprep.subr.mxu0 0.0
    %709 = vmatpush1.msra.mxu0 0.0
    %710 = vmatprep.subr.mxu0 0.0
    %711 = vmatpush1.msra.mxu0 0.0
    %712 = vmatprep.subr.mxu0 0.0
    %713 = vmatpush1.msra.mxu0 0.0
    %714 = vmatprep.subr.mxu0 0.0
    %715 = vmatpush1.msra.mxu0 0.0
    %716 = vmatprep.mubr.f32.mxu0 0.0
    %717 = vmatmul.mubr.f32.gmra.mrb[0].mxu0 %v646
    %v718 = vpop.f32.mrb[0].mxu0
    %v719 = vadd.f32 0.0, %v718
    %v720 = vpop.f32.mrb[0].mxu0
    %v721 = vadd.f32 0.0, %v720
    %722 = vdwg.mxu0
    %723 = vmatprep.subr.mxu0 %v66
    %724 = vmatpush1.msra.mxu0 %v65
    %725 = vmatprep.subr.mxu0 %v70
    %726 = vmatpush1.msra.mxu0 %v69
    %727 = vmatprep.subr.mxu0 %v74
    %728 = vmatpush1.msra.mxu0 %v73
    %729 = vmatprep.subr.mxu0 %v78
    %730 = vmatpush1.msra.mxu0 %v77
    %731 = vmatprep.subr.mxu0 %v82
    %732 = vmatpush1.msra.mxu0 %v81
    %733 = vmatprep.subr.mxu0 %v86
    %734 = vmatpush1.msra.mxu0 %v85
    %735 = vmatprep.subr.mxu0 %v90
    %736 = vmatpush1.msra.mxu0 %v89
    %737 = vmatprep.subr.mxu0 %v94
    %738 = vmatpush1.msra.mxu0 %v93
    %739 = vmatprep.subr.mxu0 %v98
    %740 = vmatpush1.msra.mxu0 %v97
    %741 = vmatprep.subr.mxu0 %v102
    %742 = vmatpush1.msra.mxu0 %v101
    %743 = vmatprep.subr.mxu0 %v106
    %744 = vmatpush1.msra.mxu0 %v105
    %745 = vmatprep.subr.mxu0 %v110
    %746 = vmatpush1.msra.mxu0 %v109
    %747 = vmatprep.subr.mxu0 %v114
    %748 = vmatpush1.msra.mxu0 %v113
    %749 = vmatprep.subr.mxu0 %v118
    %750 = vmatpush1.msra.mxu0 %v117
    %751 = vmatprep.subr.mxu0 %v122
    %752 = vmatpush1.msra.mxu0 %v121
    %753 = vmatprep.subr.mxu0 %v126
    %754 = vmatpush1.msra.mxu0 %v125
    %755 = vmatprep.subr.mxu0 0.0
    %756 = vmatpush1.msra.mxu0 0.0
    %757 = vmatprep.subr.mxu0 0.0
    %758 = vmatpush1.msra.mxu0 0.0
    %759 = vmatprep.subr.mxu0 0.0
    %760 = vmatpush1.msra.mxu0 0.0
    %761 = vmatprep.subr.mxu0 0.0
    %762 = vmatpush1.msra.mxu0 0.0
    %763 = vmatprep.subr.mxu0 0.0
    %764 = vmatpush1.msra.mxu0 0.0
    %765 = vmatprep.subr.mxu0 0.0
    %766 = vmatpush1.msra.mxu0 0.0
    %767 = vmatprep.subr.mxu0 0.0
    %768 = vmatpush1.msra.mxu0 0.0
    %769 = vmatprep.subr.mxu0 0.0
    %770 = vmatpush1.msra.mxu0 0.0
    %771 = vmatprep.subr.mxu0 0.0
    %772 = vmatpush1.msra.mxu0 0.0
    %773 = vmatprep.subr.mxu0 0.0
    %774 = vmatpush1.msra.mxu0 0.0
    %775 = vmatprep.subr.mxu0 0.0
    %776 = vmatpush1.msra.mxu0 0.0
    %777 = vmatprep.subr.mxu0 0.0
    %778 = vmatpush1.msra.mxu0 0.0
    %779 = vmatprep.subr.mxu0 0.0
    %780 = vmatpush1.msra.mxu0 0.0
    %781 = vmatprep.subr.mxu0 0.0
    %782 = vmatpush1.msra.mxu0 0.0
    %783 = vmatprep.subr.mxu0 0.0
    %784 = vmatpush1.msra.mxu0 0.0
    %785 = vmatprep.subr.mxu0 0.0
    %786 = vmatpush1.msra.mxu0 0.0
    %787 = vmatprep.mubr.f32.mxu0 0.0
    %788 = vmatmul.mubr.f32.gmra.mrb[0].mxu0 %v646
    %v789 = vpop.f32.mrb[0].mxu0
    %v790 = vadd.f32 0.0, %v789
    %v791 = vpop.f32.mrb[0].mxu0
    %v792 = vadd.f32 0.0, %v791
    %793 = vdwg.mxu0
    %v794 = vadd.f32 %v648, %v719
    %v795 = vadd.f32 %v649, %v721
    %v796 = vadd.f32 %v650, %v790
    %v797 = vadd.f32 %v651, %v792
    %v798 = vxor.u32 %v794, 2147483648
    %v799 = vmul.f32 %v798, 1.442695
    %v800 = vpow.pop %v799
    %v801 = vadd.f32 %v800, 1.0
    %v802 = vrcp.pop %v801
    %v803 = vmul.f32 1.0, %v802
    %v804 = vxor.u32 %v795, 2147483648
    %v805 = vmul.f32 %v804, 1.442695
    %v806 = vpow.pop %v805
    %v807 = vadd.f32 %v806, 1.0
    %v808 = vrcp.pop %v807
    %v809 = vmul.f32 1.0, %v808
    %v810 = vtanh.pop %v796
    %v811 = vxor.u32 %v797, 2147483648
    %v812 = vmul.f32 %v811, 1.442695
    %v813 = vpow.pop %v812
    %v814 = vadd.f32 %v813, 1.0
    %v815 = vrcp.pop %v814
    %v816 = vmul.f32 1.0, %v815
    %v817 = vmul.f32 %v809, %v644
    %v818 = vmul.f32 %v803, %v810
    %v819 = vadd.f32 %v817, %v818
    %v820 = vtanh.pop %v819
    %v821 = vmul.f32 %v816, %v820
    %s822 = scalar_lea.vmem [#allocation2], 128
    %v823 = vld [vmem:[%s822] sm:$0xff]
    %v824 = vld [vmem:[%s822 + $0x8] sm:$0xff]
    %v825 = vld [vmem:[%s822 + $0x10] sm:$0xff]
    %v826 = vld [vmem:[%s822 + $0x18] sm:$0xff]
    %827 = vmatprep.subr.mxu0 %v64
    %828 = vmatpush1.msra.mxu0 %v63
    %829 = vmatprep.subr.mxu0 %v68
    %830 = vmatpush1.msra.mxu0 %v67
    %831 = vmatprep.subr.mxu0 %v72
    %832 = vmatpush1.msra.mxu0 %v71
    %833 = vmatprep.subr.mxu0 %v76
    %834 = vmatpush1.msra.mxu0 %v75
    %835 = vmatprep.subr.mxu0 %v80
    %836 = vmatpush1.msra.mxu0 %v79
    %837 = vmatprep.subr.mxu0 %v84
    %838 = vmatpush1.msra.mxu0 %v83
    %839 = vmatprep.subr.mxu0 %v88
    %840 = vmatpush1.msra.mxu0 %v87
    %841 = vmatprep.subr.mxu0 %v92
    %842 = vmatpush1.msra.mxu0 %v91
    %843 = vmatprep.subr.mxu0 %v96
    %844 = vmatpush1.msra.mxu0 %v95
    %845 = vmatprep.subr.mxu0 %v100
    %846 = vmatpush1.msra.mxu0 %v99
    %847 = vmatprep.subr.mxu0 %v104
    %848 = vmatpush1.msra.mxu0 %v103
    %849 = vmatprep.subr.mxu0 %v108
    %850 = vmatpush1.msra.mxu0 %v107
    %851 = vmatprep.subr.mxu0 %v112
    %852 = vmatpush1.msra.mxu0 %v111
    %853 = vmatprep.subr.mxu0 %v116
    %854 = vmatpush1.msra.mxu0 %v115
    %855 = vmatprep.subr.mxu0 %v120
    %856 = vmatpush1.msra.mxu0 %v119
    %857 = vmatprep.subr.mxu0 %v124
    %858 = vmatpush1.msra.mxu0 %v123
    %859 = vmatprep.subr.mxu0 0.0
    %860 = vmatpush1.msra.mxu0 0.0
    %861 = vmatprep.subr.mxu0 0.0
    %862 = vmatpush1.msra.mxu0 0.0
    %863 = vmatprep.subr.mxu0 0.0
    %864 = vmatpush1.msra.mxu0 0.0
    %865 = vmatprep.subr.mxu0 0.0
    %866 = vmatpush1.msra.mxu0 0.0
    %867 = vmatprep.subr.mxu0 0.0
    %868 = vmatpush1.msra.mxu0 0.0
    %869 = vmatprep.subr.mxu0 0.0
    %870 = vmatpush1.msra.mxu0 0.0
    %871 = vmatprep.subr.mxu0 0.0
    %872 = vmatpush1.msra.mxu0 0.0
    %873 = vmatprep.subr.mxu0 0.0
    %874 = vmatpush1.msra.mxu0 0.0
    %875 = vmatprep.subr.mxu0 0.0
    %876 = vmatpush1.msra.mxu0 0.0
    %877 = vmatprep.subr.mxu0 0.0
    %878 = vmatpush1.msra.mxu0 0.0
    %879 = vmatprep.subr.mxu0 0.0
    %880 = vmatpush1.msra.mxu0 0.0
    %881 = vmatprep.subr.mxu0 0.0
    %882 = vmatpush1.msra.mxu0 0.0
    %883 = vmatprep.subr.mxu0 0.0
    %884 = vmatpush1.msra.mxu0 0.0
    %885 = vmatprep.subr.mxu0 0.0
    %886 = vmatpush1.msra.mxu0 0.0
    %887 = vmatprep.subr.mxu0 0.0
    %888 = vmatpush1.msra.mxu0 0.0
    %889 = vmatprep.subr.mxu0 0.0
    %890 = vmatpush1.msra.mxu0 0.0
    %891 = vmatprep.mubr.f32.mxu0 0.0
    %892 = vmatmul.mubr.f32.gmra.mrb[0].mxu0 %v821
    %v893 = vpop.f32.mrb[0].mxu0
    %v894 = vadd.f32 0.0, %v893
    %v895 = vpop.f32.mrb[0].mxu0
    %v896 = vadd.f32 0.0, %v895
    %897 = vdwg.mxu0
    %898 = vmatprep.subr.mxu0 %v66
    %899 = vmatpush1.msra.mxu0 %v65
    %900 = vmatprep.subr.mxu0 %v70
    %901 = vmatpush1.msra.mxu0 %v69
    %902 = vmatprep.subr.mxu0 %v74
    %903 = vmatpush1.msra.mxu0 %v73
    %904 = vmatprep.subr.mxu0 %v78
    %905 = vmatpush1.msra.mxu0 %v77
    %906 = vmatprep.subr.mxu0 %v82
    %907 = vmatpush1.msra.mxu0 %v81
    %908 = vmatprep.subr.mxu0 %v86
    %909 = vmatpush1.msra.mxu0 %v85
    %910 = vmatprep.subr.mxu0 %v90
    %911 = vmatpush1.msra.mxu0 %v89
    %912 = vmatprep.subr.mxu0 %v94
    %913 = vmatpush1.msra.mxu0 %v93
    %914 = vmatprep.subr.mxu0 %v98
    %915 = vmatpush1.msra.mxu0 %v97
    %916 = vmatprep.subr.mxu0 %v102
    %917 = vmatpush1.msra.mxu0 %v101
    %918 = vmatprep.subr.mxu0 %v106
    %919 = vmatpush1.msra.mxu0 %v105
    %920 = vmatprep.subr.mxu0 %v110
    %921 = vmatpush1.msra.mxu0 %v109
    %922 = vmatprep.subr.mxu0 %v114
    %923 = vmatpush1.msra.mxu0 %v113
    %924 = vmatprep.subr.mxu0 %v118
    %925 = vmatpush1.msra.mxu0 %v117
    %926 = vmatprep.subr.mxu0 %v122
    %927 = vmatpush1.msra.mxu0 %v121
    %928 = vmatprep.subr.mxu0 %v126
    %929 = vmatpush1.msra.mxu0 %v125
    %930 = vmatprep.subr.mxu0 0.0
    %931 = vmatpush1.msra.mxu0 0.0
    %932 = vmatprep.subr.mxu0 0.0
    %933 = vmatpush1.msra.mxu0 0.0
    %934 = vmatprep.subr.mxu0 0.0
    %935 = vmatpush1.msra.mxu0 0.0
    %936 = vmatprep.subr.mxu0 0.0
    %937 = vmatpush1.msra.mxu0 0.0
    %938 = vmatprep.subr.mxu0 0.0
    %939 = vmatpush1.msra.mxu0 0.0
    %940 = vmatprep.subr.mxu0 0.0
    %941 = vmatpush1.msra.mxu0 0.0
    %942 = vmatprep.subr.mxu0 0.0
    %943 = vmatpush1.msra.mxu0 0.0
    %944 = vmatprep.subr.mxu0 0.0
    %945 = vmatpush1.msra.mxu0 0.0
    %946 = vmatprep.subr.mxu0 0.0
    %947 = vmatpush1.msra.mxu0 0.0
    %948 = vmatprep.subr.mxu0 0.0
    %949 = vmatpush1.msra.mxu0 0.0
    %950 = vmatprep.subr.mxu0 0.0
    %951 = vmatpush1.msra.mxu0 0.0
    %952 = vmatprep.subr.mxu0 0.0
    %953 = vmatpush1.msra.mxu0 0.0
    %954 = vmatprep.subr.mxu0 0.0
    %955 = vmatpush1.msra.mxu0 0.0
    %956 = vmatprep.subr.mxu0 0.0
    %957 = vmatpush1.msra.mxu0 0.0
    %958 = vmatprep.subr.mxu0 0.0
    %959 = vmatpush1.msra.mxu0 0.0
    %960 = vmatprep.subr.mxu0 0.0
    %961 = vmatpush1.msra.mxu0 0.0
    %962 = vmatprep.mubr.f32.mxu0 0.0
    %963 = vmatmul.mubr.f32.gmra.mrb[0].mxu0 %v821
    %v964 = vpop.f32.mrb[0].mxu0
    %v965 = vadd.f32 0.0, %v964
    %v966 = vpop.f32.mrb[0].mxu0
    %v967 = vadd.f32 0.0, %v966
    %968 = vdwg.mxu0
    %v969 = vadd.f32 %v823, %v894
    %v970 = vadd.f32 %v824, %v896
    %v971 = vadd.f32 %v825, %v965
    %v972 = vadd.f32 %v826, %v967
    %v973 = vxor.u32 %v969, 2147483648
    %v974 = vmul.f32 %v973, 1.442695
    %v975 = vpow.pop %v974
    %v976 = vadd.f32 %v975, 1.0
    %v977 = vrcp.pop %v976
    %v978 = vmul.f32 1.0, %v977
    %v979 = vxor.u32 %v970, 2147483648
    %v980 = vmul.f32 %v979, 1.442695
    %v981 = vpow.pop %v980
    %v982 = vadd.f32 %v981, 1.0
    %v983 = vrcp.pop %v982
    %v984 = vmul.f32 1.0, %v983
    %v985 = vtanh.pop %v971
    %v986 = vxor.u32 %v972, 2147483648
    %v987 = vmul.f32 %v986, 1.442695
    %v988 = vpow.pop %v987
    %v989 = vadd.f32 %v988, 1.0
    %v990 = vrcp.pop %v989
    %v991 = vmul.f32 1.0, %v990
    %v992 = vmul.f32 %v984, %v819
    %v993 = vmul.f32 %v978, %v985
    %v994 = vadd.f32 %v992, %v993
    %v995 = vtanh.pop %v994
    %v996 = vmul.f32 %v991, %v995
    %s997 = scalar_lea.vmem [#allocation2], 160
    %v998 = vld [vmem:[%s997] sm:$0xff]
    %v999 = vld [vmem:[%s997 + $0x8] sm:$0xff]
    %v1000 = vld [vmem:[%s997 + $0x10] sm:$0xff]
    %v1001 = vld [vmem:[%s997 + $0x18] sm:$0xff]
    %1002 = vmatprep.subr.mxu0 %v64
    %1003 = vmatpush1.msra.mxu0 %v63
    %1004 = vmatprep.subr.mxu0 %v68
    %1005 = vmatpush1.msra.mxu0 %v67
    %1006 = vmatprep.subr.mxu0 %v72
    %1007 = vmatpush1.msra.mxu0 %v71
    %1008 = vmatprep.subr.mxu0 %v76
    %1009 = vmatpush1.msra.mxu0 %v75
    %1010 = vmatprep.subr.mxu0 %v80
    %1011 = vmatpush1.msra.mxu0 %v79
    %1012 = vmatprep.subr.mxu0 %v84
    %1013 = vmatpush1.msra.mxu0 %v83
    %1014 = vmatprep.subr.mxu0 %v88
    %1015 = vmatpush1.msra.mxu0 %v87
    %1016 = vmatprep.subr.mxu0 %v92
    %1017 = vmatpush1.msra.mxu0 %v91
    %1018 = vmatprep.subr.mxu0 %v96
    %1019 = vmatpush1.msra.mxu0 %v95
    %1020 = vmatprep.subr.mxu0 %v100
    %1021 = vmatpush1.msra.mxu0 %v99
    %1022 = vmatprep.subr.mxu0 %v104
    %1023 = vmatpush1.msra.mxu0 %v103
    %1024 = vmatprep.subr.mxu0 %v108
    %1025 = vmatpush1.msra.mxu0 %v107
    %1026 = vmatprep.subr.mxu0 %v112
    %1027 = vmatpush1.msra.mxu0 %v111
    %1028 = vmatprep.subr.mxu0 %v116
    %1029 = vmatpush1.msra.mxu0 %v115
    %1030 = vmatprep.subr.mxu0 %v120
    %1031 = vmatpush1.msra.mxu0 %v119
    %1032 = vmatprep.subr.mxu0 %v124
    %1033 = vmatpush1.msra.mxu0 %v123
    %1034 = vmatprep.subr.mxu0 0.0
    %1035 = vmatpush1.msra.mxu0 0.0
    %1036 = vmatprep.subr.mxu0 0.0
    %1037 = vmatpush1.msra.mxu0 0.0
    %1038 = vmatprep.subr.mxu0 0.0
    %1039 = vmatpush1.msra.mxu0 0.0
    %1040 = vmatprep.subr.mxu0 0.0
    %1041 = vmatpush1.msra.mxu0 0.0
    %1042 = vmatprep.subr.mxu0 0.0
    %1043 = vmatpush1.msra.mxu0 0.0
    %1044 = vmatprep.subr.mxu0 0.0
    %1045 = vmatpush1.msra.mxu0 0.0
    %1046 = vmatprep.subr.mxu0 0.0
    %1047 = vmatpush1.msra.mxu0 0.0
    %1048 = vmatprep.subr.mxu0 0.0
    %1049 = vmatpush1.msra.mxu0 0.0
    %1050 = vmatprep.subr.mxu0 0.0
    %1051 = vmatpush1.msra.mxu0 0.0
    %1052 = vmatprep.subr.mxu0 0.0
    %1053 = vmatpush1.msra.mxu0 0.0
    %1054 = vmatprep.subr.mxu0 0.0
    %1055 = vmatpush1.msra.mxu0 0.0
    %1056 = vmatprep.subr.mxu0 0.0
    %1057 = vmatpush1.msra.mxu0 0.0
    %1058 = vmatprep.subr.mxu0 0.0
    %1059 = vmatpush1.msra.mxu0 0.0
    %1060 = vmatprep.subr.mxu0 0.0
    %1061 = vmatpush1.msra.mxu0 0.0
    %1062 = vmatprep.subr.mxu0 0.0
    %1063 = vmatpush1.msra.mxu0 0.0
    %1064 = vmatprep.subr.mxu0 0.0
    %1065 = vmatpush1.msra.mxu0 0.0
    %1066 = vmatprep.mubr.f32.mxu0 0.0
    %1067 = vmatmul.mubr.f32.gmra.mrb[0].mxu0 %v996
    %v1068 = vpop.f32.mrb[0].mxu0
    %v1069 = vadd.f32 0.0, %v1068
    %v1070 = vpop.f32.mrb[0].mxu0
    %v1071 = vadd.f32 0.0, %v1070
    %1072 = vdwg.mxu0
    %1073 = vmatprep.subr.mxu0 %v66
    %1074 = vmatpush1.msra.mxu0 %v65
    %1075 = vmatprep.subr.mxu0 %v70
    %1076 = vmatpush1.msra.mxu0 %v69
    %1077 = vmatprep.subr.mxu0 %v74
    %1078 = vmatpush1.msra.mxu0 %v73
    %1079 = vmatprep.subr.mxu0 %v78
    %1080 = vmatpush1.msra.mxu0 %v77
    %1081 = vmatprep.subr.mxu0 %v82
    %1082 = vmatpush1.msra.mxu0 %v81
    %1083 = vmatprep.subr.mxu0 %v86
    %1084 = vmatpush1.msra.mxu0 %v85
    %1085 = vmatprep.subr.mxu0 %v90
    %1086 = vmatpush1.msra.mxu0 %v89
    %1087 = vmatprep.subr.mxu0 %v94
    %1088 = vmatpush1.msra.mxu0 %v93
    %1089 = vmatprep.subr.mxu0 %v98
    %1090 = vmatpush1.msra.mxu0 %v97
    %1091 = vmatprep.subr.mxu0 %v102
    %1092 = vmatpush1.msra.mxu0 %v101
    %1093 = vmatprep.subr.mxu0 %v106
    %1094 = vmatpush1.msra.mxu0 %v105
    %1095 = vmatprep.subr.mxu0 %v110
    %1096 = vmatpush1.msra.mxu0 %v109
    %1097 = vmatprep.subr.mxu0 %v114
    %1098 = vmatpush1.msra.mxu0 %v113
    %1099 = vmatprep.subr.mxu0 %v118
    %1100 = vmatpush1.msra.mxu0 %v117
    %1101 = vmatprep.subr.mxu0 %v122
    %1102 = vmatpush1.msra.mxu0 %v121
    %1103 = vmatprep.subr.mxu0 %v126
    %1104 = vmatpush1.msra.mxu0 %v125
    %1105 = vmatprep.subr.mxu0 0.0
    %1106 = vmatpush1.msra.mxu0 0.0
    %1107 = vmatprep.subr.mxu0 0.0
    %1108 = vmatpush1.msra.mxu0 0.0
    %1109 = vmatprep.subr.mxu0 0.0
    %1110 = vmatpush1.msra.mxu0 0.0
    %1111 = vmatprep.subr.mxu0 0.0
    %1112 = vmatpush1.msra.mxu0 0.0
    %1113 = vmatprep.subr.mxu0 0.0
    %1114 = vmatpush1.msra.mxu0 0.0
    %1115 = vmatprep.subr.mxu0 0.0
    %1116 = vmatpush1.msra.mxu0 0.0
    %1117 = vmatprep.subr.mxu0 0.0
    %1118 = vmatpush1.msra.mxu0 0.0
    %1119 = vmatprep.subr.mxu0 0.0
    %1120 = vmatpush1.msra.mxu0 0.0
    %1121 = vmatprep.subr.mxu0 0.0
    %1122 = vmatpush1.msra.mxu0 0.0
    %1123 = vmatprep.subr.mxu0 0.0
    %1124 = vmatpush1.msra.mxu0 0.0
    %1125 = vmatprep.subr.mxu0 0.0
    %1126 = vmatpush1.msra.mxu0 0.0
    %1127 = vmatprep.subr.mxu0 0.0
    %1128 = vmatpush1.msra.mxu0 0.0
    %1129 = vmatprep.subr.mxu0 0.0
    %1130 = vmatpush1.msra.mxu0 0.0
    %1131 = vmatprep.subr.mxu0 0.0
    %1132 = vmatpush1.msra.mxu0 0.0
    %1133 = vmatprep.subr.mxu0 0.0
    %1134 = vmatpush1.msra.mxu0 0.0
    %1135 = vmatprep.subr.mxu0 0.0
    %1136 = vmatpush1.msra.mxu0 0.0
    %1137 = vmatprep.mubr.f32.mxu0 0.0
    %1138 = vmatmul.mubr.f32.gmra.mrb[0].mxu0 %v996
    %v1139 = vpop.f32.mrb[0].mxu0
    %v1140 = vadd.f32 0.0, %v1139
    %v1141 = vpop.f32.mrb[0].mxu0
    %v1142 = vadd.f32 0.0, %v1141
    %1143 = vdwg.mxu0
    %v1144 = vadd.f32 %v998, %v1069
    %v1145 = vadd.f32 %v999, %v1071
    %v1146 = vadd.f32 %v1000, %v1140
    %v1147 = vadd.f32 %v1001, %v1142
    %v1148 = vxor.u32 %v1144, 2147483648
    %v1149 = vmul.f32 %v1148, 1.442695
    %v1150 = vpow.pop %v1149
    %v1151 = vadd.f32 %v1150, 1.0
    %v1152 = vrcp.pop %v1151
    %v1153 = vmul.f32 1.0, %v1152
    %v1154 = vxor.u32 %v1145, 2147483648
    %v1155 = vmul.f32 %v1154, 1.442695
    %v1156 = vpow.pop %v1155
    %v1157 = vadd.f32 %v1156, 1.0
    %v1158 = vrcp.pop %v1157
    %v1159 = vmul.f32 1.0, %v1158
    %v1160 = vtanh.pop %v1146
    %v1161 = vxor.u32 %v1147, 2147483648
    %v1162 = vmul.f32 %v1161, 1.442695
    %v1163 = vpow.pop %v1162
    %v1164 = vadd.f32 %v1163, 1.0
    %v1165 = vrcp.pop %v1164
    %v1166 = vmul.f32 1.0, %v1165
    %v1167 = vmul.f32 %v1159, %v994
    %v1168 = vmul.f32 %v1153, %v1160
    %v1169 = vadd.f32 %v1167, %v1168
    %v1170 = vtanh.pop %v1169
    %v1171 = vmul.f32 %v1166, %v1170
    %s1172 = scalar_lea.vmem [#allocation2], 192
    %v1173 = vld [vmem:[%s1172] sm:$0xff]
    %v1174 = vld [vmem:[%s1172 + $0x8] sm:$0xff]
    %v1175 = vld [vmem:[%s1172 + $0x10] sm:$0xff]
    %v1176 = vld [vmem:[%s1172 + $0x18] sm:$0xff]
    %1177 = vmatprep.subr.mxu0 %v64
    %1178 = vmatpush1.msra.mxu0 %v63
    %1179 = vmatprep.subr.mxu0 %v68
    %1180 = vmatpush1.msra.mxu0 %v67
    %1181 = vmatprep.subr.mxu0 %v72
    %1182 = vmatpush1.msra.mxu0 %v71
    %1183 = vmatprep.subr.mxu0 %v76
    %1184 = vmatpush1.msra.mxu0 %v75
    %1185 = vmatprep.subr.mxu0 %v80
    %1186 = vmatpush1.msra.mxu0 %v79
    %1187 = vmatprep.subr.mxu0 %v84
    %1188 = vmatpush1.msra.mxu0 %v83
    %1189 = vmatprep.subr.mxu0 %v88
    %1190 = vmatpush1.msra.mxu0 %v87
    %1191 = vmatprep.subr.mxu0 %v92
    %1192 = vmatpush1.msra.mxu0 %v91
    %1193 = vmatprep.subr.mxu0 %v96
    %1194 = vmatpush1.msra.mxu0 %v95
    %1195 = vmatprep.subr.mxu0 %v100
    %1196 = vmatpush1.msra.mxu0 %v99
    %1197 = vmatprep.subr.mxu0 %v104
    %1198 = vmatpush1.msra.mxu0 %v103
    %1199 = vmatprep.subr.mxu0 %v108
    %1200 = vmatpush1.msra.mxu0 %v107
    %1201 = vmatprep.subr.mxu0 %v112
    %1202 = vmatpush1.msra.mxu0 %v111
    %1203 = vmatprep.subr.mxu0 %v116
    %1204 = vmatpush1.msra.mxu0 %v115
    %1205 = vmatprep.subr.mxu0 %v120
    %1206 = vmatpush1.msra.mxu0 %v119
    %1207 = vmatprep.subr.mxu0 %v124
    %1208 = vmatpush1.msra.mxu0 %v123
    %1209 = vmatprep.subr.mxu0 0.0
    %1210 = vmatpush1.msra.mxu0 0.0
    %1211 = vmatprep.subr.mxu0 0.0
    %1212 = vmatpush1.msra.mxu0 0.0
    %1213 = vmatprep.subr.mxu0 0.0
    %1214 = vmatpush1.msra.mxu0 0.0
    %1215 = vmatprep.subr.mxu0 0.0
    %1216 = vmatpush1.msra.mxu0 0.0
    %1217 = vmatprep.subr.mxu0 0.0
    %1218 = vmatpush1.msra.mxu0 0.0
    %1219 = vmatprep.subr.mxu0 0.0
    %1220 = vmatpush1.msra.mxu0 0.0
    %1221 = vmatprep.subr.mxu0 0.0
    %1222 = vmatpush1.msra.mxu0 0.0
    %1223 = vmatprep.subr.mxu0 0.0
    %1224 = vmatpush1.msra.mxu0 0.0
    %1225 = vmatprep.subr.mxu0 0.0
    %1226 = vmatpush1.msra.mxu0 0.0
    %1227 = vmatprep.subr.mxu0 0.0
    %1228 = vmatpush1.msra.mxu0 0.0
    %1229 = vmatprep.subr.mxu0 0.0
    %1230 = vmatpush1.msra.mxu0 0.0
    %1231 = vmatprep.subr.mxu0 0.0
    %1232 = vmatpush1.msra.mxu0 0.0
    %1233 = vmatprep.subr.mxu0 0.0
    %1234 = vmatpush1.msra.mxu0 0.0
    %1235 = vmatprep.subr.mxu0 0.0
    %1236 = vmatpush1.msra.mxu0 0.0
    %1237 = vmatprep.subr.mxu0 0.0
    %1238 = vmatpush1.msra.mxu0 0.0
    %1239 = vmatprep.subr.mxu0 0.0
    %1240 = vmatpush1.msra.mxu0 0.0
    %1241 = vmatprep.mubr.f32.mxu0 0.0
    %1242 = vmatmul.mubr.f32.gmra.mrb[0].mxu0 %v1171
    %v1243 = vpop.f32.mrb[0].mxu0
    %v1244 = vadd.f32 0.0, %v1243
    %v1245 = vpop.f32.mrb[0].mxu0
    %v1246 = vadd.f32 0.0, %v1245
    %1247 = vdwg.mxu0
    %1248 = vmatprep.subr.mxu0 %v66
    %1249 = vmatpush1.msra.mxu0 %v65
    %1250 = vmatprep.subr.mxu0 %v70
    %1251 = vmatpush1.msra.mxu0 %v69
    %1252 = vmatprep.subr.mxu0 %v74
    %1253 = vmatpush1.msra.mxu0 %v73
    %1254 = vmatprep.subr.mxu0 %v78
    %1255 = vmatpush1.msra.mxu0 %v77
    %1256 = vmatprep.subr.mxu0 %v82
    %1257 = vmatpush1.msra.mxu0 %v81
    %1258 = vmatprep.subr.mxu0 %v86
    %1259 = vmatpush1.msra.mxu0 %v85
    %1260 = vmatprep.subr.mxu0 %v90
    %1261 = vmatpush1.msra.mxu0 %v89
    %1262 = vmatprep.subr.mxu0 %v94
    %1263 = vmatpush1.msra.mxu0 %v93
    %1264 = vmatprep.subr.mxu0 %v98
    %1265 = vmatpush1.msra.mxu0 %v97
    %1266 = vmatprep.subr.mxu0 %v102
    %1267 = vmatpush1.msra.mxu0 %v101
    %1268 = vmatprep.subr.mxu0 %v106
    %1269 = vmatpush1.msra.mxu0 %v105
    %1270 = vmatprep.subr.mxu0 %v110
    %1271 = vmatpush1.msra.mxu0 %v109
    %1272 = vmatprep.subr.mxu0 %v114
    %1273 = vmatpush1.msra.mxu0 %v113
    %1274 = vmatprep.subr.mxu0 %v118
    %1275 = vmatpush1.msra.mxu0 %v117
    %1276 = vmatprep.subr.mxu0 %v122
    %1277 = vmatpush1.msra.mxu0 %v121
    %1278 = vmatprep.subr.mxu0 %v126
    %1279 = vmatpush1.msra.mxu0 %v125
    %1280 = vmatprep.subr.mxu0 0.0
    %1281 = vmatpush1.msra.mxu0 0.0
    %1282 = vmatprep.subr.mxu0 0.0
    %1283 = vmatpush1.msra.mxu0 0.0
    %1284 = vmatprep.subr.mxu0 0.0
    %1285 = vmatpush1.msra.mxu0 0.0
    %1286 = vmatprep.subr.mxu0 0.0
    %1287 = vmatpush1.msra.mxu0 0.0
    %1288 = vmatprep.subr.mxu0 0.0
    %1289 = vmatpush1.msra.mxu0 0.0
    %1290 = vmatprep.subr.mxu0 0.0
    %1291 = vmatpush1.msra.mxu0 0.0
    %1292 = vmatprep.subr.mxu0 0.0
    %1293 = vmatpush1.msra.mxu0 0.0
    %1294 = vmatprep.subr.mxu0 0.0
    %1295 = vmatpush1.msra.mxu0 0.0
    %1296 = vmatprep.subr.mxu0 0.0
    %1297 = vmatpush1.msra.mxu0 0.0
    %1298 = vmatprep.subr.mxu0 0.0
    %1299 = vmatpush1.msra.mxu0 0.0
    %1300 = vmatprep.subr.mxu0 0.0
    %1301 = vmatpush1.msra.mxu0 0.0
    %1302 = vmatprep.subr.mxu0 0.0
    %1303 = vmatpush1.msra.mxu0 0.0
    %1304 = vmatprep.subr.mxu0 0.0
    %1305 = vmatpush1.msra.mxu0 0.0
    %1306 = vmatprep.subr.mxu0 0.0
    %1307 = vmatpush1.msra.mxu0 0.0
    %1308 = vmatprep.subr.mxu0 0.0
    %1309 = vmatpush1.msra.mxu0 0.0
    %1310 = vmatprep.subr.mxu0 0.0
    %1311 = vmatpush1.msra.mxu0 0.0
    %1312 = vmatprep.mubr.f32.mxu0 0.0
    %1313 = vmatmul.mubr.f32.gmra.mrb[0].mxu0 %v1171
    %v1314 = vpop.f32.mrb[0].mxu0
    %v1315 = vadd.f32 0.0, %v1314
    %v1316 = vpop.f32.mrb[0].mxu0
    %v1317 = vadd.f32 0.0, %v1316
    %1318 = vdwg.mxu0
    %v1319 = vadd.f32 %v1173, %v1244
    %v1320 = vadd.f32 %v1174, %v1246
    %v1321 = vadd.f32 %v1175, %v1315
    %v1322 = vadd.f32 %v1176, %v1317
    %v1323 = vxor.u32 %v1319, 2147483648
    %v1324 = vmul.f32 %v1323, 1.442695
    %v1325 = vpow.pop %v1324
    %v1326 = vadd.f32 %v1325, 1.0
    %v1327 = vrcp.pop %v1326
    %v1328 = vmul.f32 1.0, %v1327
    %v1329 = vxor.u32 %v1320, 2147483648
    %v1330 = vmul.f32 %v1329, 1.442695
    %v1331 = vpow.pop %v1330
    %v1332 = vadd.f32 %v1331, 1.0
    %v1333 = vrcp.pop %v1332
    %v1334 = vmul.f32 1.0, %v1333
    %v1335 = vtanh.pop %v1321
    %v1336 = vxor.u32 %v1322, 2147483648
    %v1337 = vmul.f32 %v1336, 1.442695
    %v1338 = vpow.pop %v1337
    %v1339 = vadd.f32 %v1338, 1.0
    %v1340 = vrcp.pop %v1339
    %v1341 = vmul.f32 1.0, %v1340
    %v1342 = vmul.f32 %v1334, %v1169
    %v1343 = vmul.f32 %v1328, %v1335
    %v1344 = vadd.f32 %v1342, %v1343
    %v1345 = vtanh.pop %v1344
    %v1346 = vmul.f32 %v1341, %v1345
    %s1347 = scalar_lea.vmem [#allocation2], 224
    %v1348 = vld [vmem:[%s1347] sm:$0xff]
    %v1349 = vld [vmem:[%s1347 + $0x8] sm:$0xff]
    %v1350 = vld [vmem:[%s1347 + $0x10] sm:$0xff]
    %v1351 = vld [vmem:[%s1347 + $0x18] sm:$0xff]
    %1352 = vmatprep.subr.mxu0 %v64
    %1353 = vmatpush1.msra.mxu0 %v63
    %1354 = vmatprep.subr.mxu0 %v68
    %1355 = vmatpush1.msra.mxu0 %v67
    %1356 = vmatprep.subr.mxu0 %v72
    %1357 = vmatpush1.msra.mxu0 %v71
    %1358 = vmatprep.subr.mxu0 %v76
    %1359 = vmatpush1.msra.mxu0 %v75
    %1360 = vmatprep.subr.mxu0 %v80
    %1361 = vmatpush1.msra.mxu0 %v79
    %1362 = vmatprep.subr.mxu0 %v84
    %1363 = vmatpush1.msra.mxu0 %v83
    %1364 = vmatprep.subr.mxu0 %v88
    %1365 = vmatpush1.msra.mxu0 %v87
    %1366 = vmatprep.subr.mxu0 %v92
    %1367 = vmatpush1.msra.mxu0 %v91
    %1368 = vmatprep.subr.mxu0 %v96
    %1369 = vmatpush1.msra.mxu0 %v95
    %1370 = vmatprep.subr.mxu0 %v100
    %1371 = vmatpush1.msra.mxu0 %v99
    %1372 = vmatprep.subr.mxu0 %v104
    %1373 = vmatpush1.msra.mxu0 %v103
    %1374 = vmatprep.subr.mxu0 %v108
    %1375 = vmatpush1.msra.mxu0 %v107
    %1376 = vmatprep.subr.mxu0 %v112
    %1377 = vmatpush1.msra.mxu0 %v111
    %1378 = vmatprep.subr.mxu0 %v116
    %1379 = vmatpush1.msra.mxu0 %v115
    %1380 = vmatprep.subr.mxu0 %v120
    %1381 = vmatpush1.msra.mxu0 %v119
    %1382 = vmatprep.subr.mxu0 %v124
    %1383 = vmatpush1.msra.mxu0 %v123
    %1384 = vmatprep.subr.mxu0 0.0
    %1385 = vmatpush1.msra.mxu0 0.0
    %1386 = vmatprep.subr.mxu0 0.0
    %1387 = vmatpush1.msra.mxu0 0.0
    %1388 = vmatprep.subr.mxu0 0.0
    %1389 = vmatpush1.msra.mxu0 0.0
    %1390 = vmatprep.subr.mxu0 0.0
    %1391 = vmatpush1.msra.mxu0 0.0
    %1392 = vmatprep.subr.mxu0 0.0
    %1393 = vmatpush1.msra.mxu0 0.0
    %1394 = vmatprep.subr.mxu0 0.0
    %1395 = vmatpush1.msra.mxu0 0.0
    %1396 = vmatprep.subr.mxu0 0.0
    %1397 = vmatpush1.msra.mxu0 0.0
    %1398 = vmatprep.subr.mxu0 0.0
    %1399 = vmatpush1.msra.mxu0 0.0
    %1400 = vmatprep.subr.mxu0 0.0
    %1401 = vmatpush1.msra.mxu0 0.0
    %1402 = vmatprep.subr.mxu0 0.0
    %1403 = vmatpush1.msra.mxu0 0.0
    %1404 = vmatprep.subr.mxu0 0.0
    %1405 = vmatpush1.msra.mxu0 0.0
    %1406 = vmatprep.subr.mxu0 0.0
    %1407 = vmatpush1.msra.mxu0 0.0
    %1408 = vmatprep.subr.mxu0 0.0
    %1409 = vmatpush1.msra.mxu0 0.0
    %1410 = vmatprep.subr.mxu0 0.0
    %1411 = vmatpush1.msra.mxu0 0.0
    %1412 = vmatprep.subr.mxu0 0.0
    %1413 = vmatpush1.msra.mxu0 0.0
    %1414 = vmatprep.subr.mxu0 0.0
    %1415 = vmatpush1.msra.mxu0 0.0
    %1416 = vmatprep.mubr.f32.mxu0 0.0
    %1417 = vmatmul.mubr.f32.gmra.mrb[0].mxu0 %v1346
    %v1418 = vpop.f32.mrb[0].mxu0
    %v1419 = vadd.f32 0.0, %v1418
    %v1420 = vpop.f32.mrb[0].mxu0
    %v1421 = vadd.f32 0.0, %v1420
    %1422 = vdwg.mxu0
    %1423 = vmatprep.subr.mxu0 %v66
    %1424 = vmatpush1.msra.mxu0 %v65
    %1425 = vmatprep.subr.mxu0 %v70
    %1426 = vmatpush1.msra.mxu0 %v69
    %1427 = vmatprep.subr.mxu0 %v74
    %1428 = vmatpush1.msra.mxu0 %v73
    %1429 = vmatprep.subr.mxu0 %v78
    %1430 = vmatpush1.msra.mxu0 %v77
    %1431 = vmatprep.subr.mxu0 %v82
    %1432 = vmatpush1.msra.mxu0 %v81
    %1433 = vmatprep.subr.mxu0 %v86
    %1434 = vmatpush1.msra.mxu0 %v85
    %1435 = vmatprep.subr.mxu0 %v90
    %1436 = vmatpush1.msra.mxu0 %v89
    %1437 = vmatprep.subr.mxu0 %v94
    %1438 = vmatpush1.msra.mxu0 %v93
    %1439 = vmatprep.subr.mxu0 %v98
    %1440 = vmatpush1.msra.mxu0 %v97
    %1441 = vmatprep.subr.mxu0 %v102
    %1442 = vmatpush1.msra.mxu0 %v101
    %1443 = vmatprep.subr.mxu0 %v106
    %1444 = vmatpush1.msra.mxu0 %v105
    %1445 = vmatprep.subr.mxu0 %v110
    %1446 = vmatpush1.msra.mxu0 %v109
    %1447 = vmatprep.subr.mxu0 %v114
    %1448 = vmatpush1.msra.mxu0 %v113
    %1449 = vmatprep.subr.mxu0 %v118
    %1450 = vmatpush1.msra.mxu0 %v117
    %1451 = vmatprep.subr.mxu0 %v122
    %1452 = vmatpush1.msra.mxu0 %v121
    %1453 = vmatprep.subr.mxu0 %v126
    %1454 = vmatpush1.msra.mxu0 %v125
    %1455 = vmatprep.subr.mxu0 0.0
    %1456 = vmatpush1.msra.mxu0 0.0
    %1457 = vmatprep.subr.mxu0 0.0
    %1458 = vmatpush1.msra.mxu0 0.0
    %1459 = vmatprep.subr.mxu0 0.0
    %1460 = vmatpush1.msra.mxu0 0.0
    %1461 = vmatprep.subr.mxu0 0.0
    %1462 = vmatpush1.msra.mxu0 0.0
    %1463 = vmatprep.subr.mxu0 0.0
    %1464 = vmatpush1.msra.mxu0 0.0
    %1465 = vmatprep.subr.mxu0 0.0
    %1466 = vmatpush1.msra.mxu0 0.0
    %1467 = vmatprep.subr.mxu0 0.0
    %1468 = vmatpush1.msra.mxu0 0.0
    %1469 = vmatprep.subr.mxu0 0.0
    %1470 = vmatpush1.msra.mxu0 0.0
    %1471 = vmatprep.subr.mxu0 0.0
    %1472 = vmatpush1.msra.mxu0 0.0
    %1473 = vmatprep.subr.mxu0 0.0
    %1474 = vmatpush1.msra.mxu0 0.0
    %1475 = vmatprep.subr.mxu0 0.0
    %1476 = vmatpush1.msra.mxu0 0.0
    %1477 = vmatprep.subr.mxu0 0.0
    %1478 = vmatpush1.msra.mxu0 0.0
    %1479 = vmatprep.subr.mxu0 0.0
    %1480 = vmatpush1.msra.mxu0 0.0
    %1481 = vmatprep.subr.mxu0 0.0
    %1482 = vmatpush1.msra.mxu0 0.0
    %1483 = vmatprep.subr.mxu0 0.0
    %1484 = vmatpush1.msra.mxu0 0.0
    %1485 = vmatprep.subr.mxu0 0.0
    %1486 = vmatpush1.msra.mxu0 0.0
    %1487 = vmatprep.mubr.f32.mxu0 0.0
    %1488 = vmatmul.mubr.f32.gmra.mrb[0].mxu0 %v1346
    %v1489 = vpop.f32.mrb[0].mxu0
    %v1490 = vadd.f32 0.0, %v1489
    %v1491 = vpop.f32.mrb[0].mxu0
    %v1492 = vadd.f32 0.0, %v1491
    %1493 = vdwg.mxu0
    %v1494 = vadd.f32 %v1348, %v1419
    %v1495 = vadd.f32 %v1349, %v1421
    %v1496 = vadd.f32 %v1350, %v1490
    %v1497 = vadd.f32 %v1351, %v1492
    %v1498 = vxor.u32 %v1494, 2147483648
    %v1499 = vmul.f32 %v1498, 1.442695
    %v1500 = vpow.pop %v1499
    %v1501 = vadd.f32 %v1500, 1.0
    %v1502 = vrcp.pop %v1501
    %v1503 = vmul.f32 1.0, %v1502
    %v1504 = vxor.u32 %v1495, 2147483648
    %v1505 = vmul.f32 %v1504, 1.442695
    %v1506 = vpow.pop %v1505
    %v1507 = vadd.f32 %v1506, 1.0
    %v1508 = vrcp.pop %v1507
    %v1509 = vmul.f32 1.0, %v1508
    %v1510 = vtanh.pop %v1496
    %v1511 = vxor.u32 %v1497, 2147483648
    %v1512 = vmul.f32 %v1511, 1.442695
    %v1513 = vpow.pop %v1512
    %v1514 = vadd.f32 %v1513, 1.0
    %v1515 = vrcp.pop %v1514
    %v1516 = vmul.f32 1.0, %v1515
    %v1517 = vmul.f32 %v1509, %v1344
    %v1518 = vmul.f32 %v1503, %v1510
    %v1519 = vadd.f32 %v1517, %v1518
    %v1520 = vtanh.pop %v1519
    %v1521 = vmul.f32 %v1516, %v1520
    %v1522 = vld [vmem:[#allocation7] sm:$0xff]
    %v1523 = vld [vmem:[#allocation7 + $0x8] sm:$0xff]
    %v1524 = vld [vmem:[#allocation7 + $0x10] sm:$0xff]
    %v1525 = vld [vmem:[#allocation7 + $0x18] sm:$0xff]
    %v1526 = vld [vmem:[#allocation7 + $0x20] sm:$0xff]
    %v1527 = vld [vmem:[#allocation7 + $0x28] sm:$0xff]
    %v1528 = vld [vmem:[#allocation7 + $0x30] sm:$0xff]
    %v1529 = vld [vmem:[#allocation7 + $0x38] sm:$0xff]
    %v1530 = vld [vmem:[#allocation7 + $0x40] sm:$0xff]
    %v1531 = vld [vmem:[#allocation7 + $0x48] sm:$0xff]
    %v1532 = vld [vmem:[#allocation7 + $0x50] sm:$0xff]
    %v1533 = vld [vmem:[#allocation7 + $0x58] sm:$0xff]
    %v1534 = vld [vmem:[#allocation7 + $0x60] sm:$0xff]
    %v1535 = vld [vmem:[#allocation7 + $0x68] sm:$0xff]
    %v1536 = vld [vmem:[#allocation7 + $0x70] sm:$0xff]
    %v1537 = vld [vmem:[#allocation7 + $0x78] sm:$0xff]
    %v1538 = vld [vmem:[%s3] sm:$0x1]
    %v1540 = vlaneseq
    %v1541 = vshrl.u32 %v1540, 7
    %v1542 = vsub.s32 0, %v1541
    %v1543 = vrot.slane %v1538, %v1542
    %1545 = vmatprep.subr.mxu0 0.0
    %1546 = vmatpush1.msra.mxu0 %v1522
    %1547 = vmatprep.subr.mxu0 0.0
    %1548 = vmatpush1.msra.mxu0 %v1523
    %1549 = vmatprep.subr.mxu0 0.0
    %1550 = vmatpush1.msra.mxu0 %v1524
    %1551 = vmatprep.subr.mxu0 0.0
    %1552 = vmatpush1.msra.mxu0 %v1525
    %1553 = vmatprep.subr.mxu0 0.0
    %1554 = vmatpush1.msra.mxu0 %v1526
    %1555 = vmatprep.subr.mxu0 0.0
    %1556 = vmatpush1.msra.mxu0 %v1527
    %1557 = vmatprep.subr.mxu0 0.0
    %1558 = vmatpush1.msra.mxu0 %v1528
    %1559 = vmatprep.subr.mxu0 0.0
    %1560 = vmatpush1.msra.mxu0 %v1529
    %1561 = vmatprep.subr.mxu0 0.0
    %1562 = vmatpush1.msra.mxu0 %v1530
    %1563 = vmatprep.subr.mxu0 0.0
    %1564 = vmatpush1.msra.mxu0 %v1531
    %1565 = vmatprep.subr.mxu0 0.0
    %1566 = vmatpush1.msra.mxu0 %v1532
    %1567 = vmatprep.subr.mxu0 0.0
    %1568 = vmatpush1.msra.mxu0 %v1533
    %1569 = vmatprep.subr.mxu0 0.0
    %1570 = vmatpush1.msra.mxu0 %v1534
    %1571 = vmatprep.subr.mxu0 0.0
    %1572 = vmatpush1.msra.mxu0 %v1535
    %1573 = vmatprep.subr.mxu0 0.0
    %1574 = vmatpush1.msra.mxu0 %v1536
    %1575 = vmatprep.subr.mxu0 0.0
    %1576 = vmatpush1.msra.mxu0 %v1537
    %1577 = vmatprep.subr.mxu0 0.0
    %1578 = vmatpush1.msra.mxu0 0.0
    %1579 = vmatprep.subr.mxu0 0.0
    %1580 = vmatpush1.msra.mxu0 0.0
    %1581 = vmatprep.subr.mxu0 0.0
    %1582 = vmatpush1.msra.mxu0 0.0
    %1583 = vmatprep.subr.mxu0 0.0
    %1584 = vmatpush1.msra.mxu0 0.0
    %1585 = vmatprep.subr.mxu0 0.0
    %1586 = vmatpush1.msra.mxu0 0.0
    %1587 = vmatprep.subr.mxu0 0.0
    %1588 = vmatpush1.msra.mxu0 0.0
    %1589 = vmatprep.subr.mxu0 0.0
    %1590 = vmatpush1.msra.mxu0 0.0
    %1591 = vmatprep.subr.mxu0 0.0
    %1592 = vmatpush1.msra.mxu0 0.0
    %1593 = vmatprep.subr.mxu0 0.0
    %1594 = vmatpush1.msra.mxu0 0.0
    %1595 = vmatprep.subr.mxu0 0.0
    %1596 = vmatpush1.msra.mxu0 0.0
    %1597 = vmatprep.subr.mxu0 0.0
    %1598 = vmatpush1.msra.mxu0 0.0
    %1599 = vmatprep.subr.mxu0 0.0
    %1600 = vmatpush1.msra.mxu0 0.0
    %1601 = vmatprep.subr.mxu0 0.0
    %1602 = vmatpush1.msra.mxu0 0.0
    %1603 = vmatprep.subr.mxu0 0.0
    %1604 = vmatpush1.msra.mxu0 0.0
    %1605 = vmatprep.subr.mxu0 0.0
    %1606 = vmatpush1.msra.mxu0 0.0
    %1607 = vmatprep.subr.mxu0 0.0
    %1608 = vmatpush1.msra.mxu0 0.0
    %1609 = vmatprep.mubr.f32.mxu0 0.0
    %1610 = vmatmul.mubr.f32.gmra.mrb[0].mxu0 %v1521
    %v1611 = vpop.f32.mrb[0].mxu0
    %v1612 = vadd.f32 %v1543, %v1611
    %v1613 = vpop.f32.mrb[0].mxu0
    %1614 = vdwg.mxu0
    %1615 = vst [vmem:[#allocation8] sm:$0xff] %v1612
    // Predicated region
    $region30: #{tpu_custom_call.1} parent=1 // pred_check
      _
    $region31: #{tpu_custom_call.1} parent=1 // pred_check_branch
      %1617 = sbr.rel (0) target = $region33
    $region32: #{tpu_custom_call.1} parent=1 // pred_region
      %s1619 = ssub.s32 128, 128
      %1620 = vsyncadd [#allocation4], %s1619
      %s1622 = sshll.u32 [#allocation8], 4
      %s1623 = int_to_ptr.vmem [resolvable:$true] %s1622
      %1625 = dma.vmem_to_hbm [thread:$0]  %s1623, 128, %s4, [#allocation4]
    $region33: #{tpu_custom_call.1} parent=1 // pred_fallthru
      _
    // Predicated region
    $region34: #{tpu_custom_call.1} parent=1 // pred_check
      _
    $region35: #{tpu_custom_call.1} parent=1 // pred_check_branch
      %1627 = sbr.rel (0) target = $region37
    $region36: #{tpu_custom_call.1} parent=1 // pred_region
      %1628 = dma.done [#allocation4], 128
    $region37: #{tpu_custom_call.1} parent=1 // pred_fallthru
      _
    %1629 = vsyncpa [#allocation3], 1
    %1630 = vsyncpa [#allocation6], 1
    %1631 = vsyncpa [#allocation4], 1

</llo_original>
